<compile_context>
chip_gen: v6e
topology: v6e:2x2x1
jax: 0.10.0
libtpu: 0.0.40
codegen_flags: <defaults>
</compile_context>

<pallas_src>
import functools

import jax
import jax.numpy as jnp
from jax.experimental import pallas as pl
from jax.experimental.pallas import tpu as pltpu


def _ceil_to(v, m):
    return (v + m - 1) // m * m


def _vmem_cap_bytes():
    try:
        return int(pltpu.get_tpu_info().vmem_capacity_bytes)
    except Exception:
        return 64 * 1024 * 1024          # v7x-safe fallback


_VMEM_CAP = _vmem_cap_bytes()
_GEMM_VMEM = min(_VMEM_CAP * 3 // 4, 64 * 1024 * 1024)      # ~48 MiB on v7x
_LSTM_VMEM = min(int(_VMEM_CAP * 0.85), 100 * 1024 * 1024)  # ~54 MiB v7x / 100 MiB v5e,v6e


def _pick_tile(d, cands=(512, 256, 128)):
    """Largest MXU-friendly tile with <=12.5% padding waste (256-multiples,
    friendly to the 2x256^2 MXUs of v6e/v7x); returns (tile, padded_dim)."""
    for c in cands:
        p = _ceil_to(d, c)
        if d >= c and p - d <= max(d // 8, 0):
            return c, p
    return 128, _ceil_to(d, 128)


def _pick_tile_k(d):
    """Reduction-dim tile: take the full K (padded to 128) when it fits one
    deep tile -> single k step, minimal grid/accumulator overhead."""
    if d <= 2048:
        p = _ceil_to(d, 128)
        return p, p
    return 512, _ceil_to(d, 512)


# -----------------------------------------------------------------------------
# Pallas kernels
# -----------------------------------------------------------------------------
def _mm_kernel(a_ref, b_ref, bias_ref, o_ref, acc_ref, *, relu):
    """Tiled bf16 matmul, f32 accumulator, fused bias (+ optional ReLU)."""
    k = pl.program_id(2)

    @pl.when(k == 0)
    def _init():
        acc_ref[...] = jnp.zeros_like(acc_ref)

    acc_ref[...] += jnp.dot(a_ref[...], b_ref[...],
                            preferred_element_type=jnp.float32)

    @pl.when(k == pl.num_programs(2) - 1)
    def _fin():
        out = acc_ref[...] + bias_ref[...]
        if relu:
            out = jnp.maximum(out, 0.0)
        o_ref[...] = out.astype(o_ref.dtype)


def _mm_res_kernel(a_ref, b_ref, bias_ref, res_ref, o_ref, acc_ref, *, relu):
    """Same as _mm_kernel, with a bf16 residual tile added in the finalize
    branch (fused `out = relu(conv + bias + identity)` epilogue)."""
    k = pl.program_id(2)

    @pl.when(k == 0)
    def _init():
        acc_ref[...] = jnp.zeros_like(acc_ref)

    acc_ref[...] += jnp.dot(a_ref[...], b_ref[...],
                            preferred_element_type=jnp.float32)

    @pl.when(k == pl.num_programs(2) - 1)
    def _fin():
        out = acc_ref[...] + bias_ref[...] + res_ref[...].astype(jnp.float32)
        if relu:
            out = jnp.maximum(out, 0.0)
        o_ref[...] = out.astype(o_ref.dtype)


@functools.lru_cache(maxsize=None)
def _matmul_call(Mp, Kp, Np, tm, tk, tn, relu, has_res, out_dtype):
    if has_res:
        kern = functools.partial(_mm_res_kernel, relu=relu)
        in_specs = [pl.BlockSpec((tm, tk), lambda i, j, k: (i, k)),
                    pl.BlockSpec((tk, tn), lambda i, j, k: (k, j)),
                    pl.BlockSpec((1, tn), lambda i, j, k: (0, j)),
                    pl.BlockSpec((tm, tn), lambda i, j, k: (i, j))]
    else:
        kern = functools.partial(_mm_kernel, relu=relu)
        in_specs = [pl.BlockSpec((tm, tk), lambda i, j, k: (i, k)),
                    pl.BlockSpec((tk, tn), lambda i, j, k: (k, j)),
                    pl.BlockSpec((1, tn), lambda i, j, k: (0, j))]
    return jax.jit(pl.pallas_call(
        kern,
        out_shape=jax.ShapeDtypeStruct((Mp, Np), out_dtype),
        grid_spec=pltpu.PrefetchScalarGridSpec(
            num_scalar_prefetch=0,
            grid=(Mp // tm, Np // tn, Kp // tk),
            in_specs=in_specs,
            out_specs=pl.BlockSpec((tm, tn), lambda i, j, k: (i, j)),
            scratch_shapes=[pltpu.VMEM((tm, tn), jnp.float32)],
        ),
        compiler_params=pltpu.CompilerParams(
            dimension_semantics=("parallel", "parallel", "arbitrary"),
            vmem_limit_bytes=_GEMM_VMEM),
    ))


@functools.partial(jax.jit, static_argnames=("relu", "out_dtype"))
def pallas_matmul(a, b, bias, residual=None, *, relu=False,
                  out_dtype=jnp.bfloat16):
    """out = a @ b + bias[None, :] (+ residual), optional fused ReLU.
    Operands cast to bf16 (f32 accumulation); output dtype = out_dtype."""
    M, K = a.shape
    K2, N = b.shape
    assert K == K2
    tm, Mp = _pick_tile(M)
    tk, Kp = _pick_tile_k(K)
    tn, Np = _pick_tile(N)
    a_p = jnp.pad(a.astype(jnp.bfloat16), ((0, Mp - M), (0, Kp - K)))
    b_p = jnp.pad(b.astype(jnp.bfloat16), ((0, Kp - K), (0, Np - N)))
    bias_p = jnp.pad(bias.astype(jnp.float32), ((0, Np - N),)).reshape(1, Np)
    if residual is None:
        out = _matmul_call(Mp, Kp, Np, tm, tk, tn, bool(relu), False,
                           out_dtype)(a_p, b_p, bias_p)
    else:
        r_p = jnp.pad(residual.astype(jnp.bfloat16),
                      ((0, Mp - M), (0, Np - N)))
        out = _matmul_call(Mp, Kp, Np, tm, tk, tn, bool(relu), True,
                           out_dtype)(a_p, b_p, bias_p, r_p)
    return out[:M, :N]


def _gconv_kernel(a_ref, w_ref, bias_ref, o_ref):
    """One 128-output-channel slab of the groups=32 3x3 conv: full-K dot +
    fused bias/ReLU.  Grid = (slab, row-tile)."""
    out = jnp.dot(a_ref[0], w_ref[0], preferred_element_type=jnp.float32)
    out = out + bias_ref[0]
    o_ref[...] = jnp.maximum(out, 0.0).astype(o_ref.dtype)


@functools.lru_cache(maxsize=None)
def _gconv_call(n_slabs, Mp, Kp, tm):
    return jax.jit(pl.pallas_call(
        _gconv_kernel,
        out_shape=jax.ShapeDtypeStruct((Mp, n_slabs * 128), jnp.bfloat16),
        grid_spec=pltpu.PrefetchScalarGridSpec(
            num_scalar_prefetch=0,
            grid=(n_slabs, Mp // tm),
            in_specs=[pl.BlockSpec((1, tm, Kp), lambda s, i: (s, i, 0)),
                      pl.BlockSpec((1, Kp, 128), lambda s, i: (s, 0, 0)),
                      pl.BlockSpec((1, 1, 128), lambda s, i: (s, 0, 0))],
            out_specs=pl.BlockSpec((tm, 128), lambda s, i: (i, s)),
        ),
        compiler_params=pltpu.CompilerParams(
            dimension_semantics=("parallel", "parallel"),
            vmem_limit_bytes=_GEMM_VMEM),
    ))


def _max9_kernel(*refs):
    """Max over 9 tap inputs (3x3 maxpool), tiled over rows."""
    o_ref = refs[-1]
    m = refs[0][...]
    for r in refs[1:9]:
        m = jnp.maximum(m, r[...])
    o_ref[...] = m


@functools.lru_cache(maxsize=None)
def _max9_call(Rp, Cc, tm):
    return jax.jit(pl.pallas_call(
        _max9_kernel,
        out_shape=jax.ShapeDtypeStruct((Rp, Cc), jnp.bfloat16),
        grid_spec=pltpu.PrefetchScalarGridSpec(
            num_scalar_prefetch=0,
            grid=(Rp // tm,),
            in_specs=[pl.BlockSpec((tm, Cc), lambda i: (i, 0))] * 9,
            out_specs=pl.BlockSpec((tm, Cc), lambda i: (i, 0)),
        ),
        compiler_params=pltpu.CompilerParams(
            dimension_semantics=("parallel",),
            vmem_limit_bytes=_GEMM_VMEM),
    ))


def _mean_kernel(x_ref, o_ref):
    n = x_ref.shape[1]
    acc = x_ref[:, 0, :].astype(jnp.float32)
    for k in range(1, n):
        acc = acc + x_ref[:, k, :].astype(jnp.float32)
    o_ref[...] = (acc * (1.0 / n)).astype(o_ref.dtype)


@functools.lru_cache(maxsize=None)
def _mean_call(M, HW, C, tc):
    return jax.jit(pl.pallas_call(
        _mean_kernel,
        out_shape=jax.ShapeDtypeStruct((M, C), jnp.float32),
        grid_spec=pltpu.PrefetchScalarGridSpec(
            num_scalar_prefetch=0,
            grid=(C // tc,),
            in_specs=[pl.BlockSpec((M, HW, tc), lambda j: (0, 0, j))],
            out_specs=pl.BlockSpec((M, tc), lambda j: (0, j)),
        ),
        compiler_params=pltpu.CompilerParams(
            dimension_semantics=("parallel",),
            vmem_limit_bytes=_GEMM_VMEM),
    ))


def _lstm_seq_kernel(ih_ref, whh_ref, out_ref, w_vmem, h_sc, c_sc, *, Hd):
    """Whole LSTM sequence in one kernel.  grid=(T,).  The 32 MiB bf16
    recurrent weight (gates i|f|g|o concatenated along N) is DMA'd from HBM
    into a single VMEM scratch at t==0 and stays resident; h/c persist in
    VMEM scratch.  One fused (Lb x H)@(H x 4H) MXU dot per step."""
    t = pl.program_id(0)

    @pl.when(t == 0)
    def _init():
        pltpu.sync_copy(whh_ref, w_vmem)          # weights resident for all T
        h_sc[...] = jnp.zeros_like(h_sc)
        c_sc[...] = jnp.zeros_like(c_sc)

    gates = ih_ref[0] + jnp.dot(h_sc[...].astype(jnp.bfloat16), w_vmem[...],
                                preferred_element_type=jnp.float32)
    i = jax.nn.sigmoid(gates[:, 0 * Hd:1 * Hd])
    f = jax.nn.sigmoid(gates[:, 1 * Hd:2 * Hd])
    g = jnp.tanh(gates[:, 2 * Hd:3 * Hd])
    o = jax.nn.sigmoid(gates[:, 3 * Hd:4 * Hd])
    c_new = f * c_sc[...] + i * g
    h_new = o * jnp.tanh(c_new)
    c_sc[...] = c_new
    h_sc[...] = h_new
    out_ref[0] = h_new


@functools.lru_cache(maxsize=None)
def _lstm_seq_call(T, Lbp, Hd):
    kern = functools.partial(_lstm_seq_kernel, Hd=Hd)
    return jax.jit(pl.pallas_call(
        kern,
        out_shape=jax.ShapeDtypeStruct((T, Lbp, Hd), jnp.float32),
        grid_spec=pltpu.PrefetchScalarGridSpec(
            num_scalar_prefetch=0,
            grid=(T,),
            in_specs=[pl.BlockSpec((1, Lbp, 4 * Hd), lambda t: (t, 0, 0)),
                      pl.BlockSpec(memory_space=pl.ANY)],
            out_specs=pl.BlockSpec((1, Lbp, Hd), lambda t: (t, 0, 0)),
            scratch_shapes=[pltpu.VMEM((Hd, 4 * Hd), jnp.bfloat16),   # 32 MiB
                            pltpu.VMEM((Lbp, Hd), jnp.float32),        # h
                            pltpu.VMEM((Lbp, Hd), jnp.float32)],       # c
        ),
        compiler_params=pltpu.CompilerParams(
            dimension_semantics=("arbitrary",),
            vmem_limit_bytes=_LSTM_VMEM),
    ))


# -----------------------------------------------------------------------------
# NN building blocks (glue = im2col / pad / reshape, hot path = Pallas kernels)
# -----------------------------------------------------------------------------
@functools.partial(jax.jit, static_argnames=("stride", "padding", "relu"))
def conv2d(x, w, bias, residual=None, *, stride=1, padding=0, relu=False):
    """NHWC conv: bf16 im2col + Pallas tiled MXU matmul (bias/ReLU/residual
    fused in the epilogue, bf16 output)."""
    B, H, W, Cin = x.shape
    KH, KW, _, Cout = w.shape
    Ho = (H + 2 * padding - KH) // stride + 1
    Wo = (W + 2 * padding - KW) // stride + 1
    xb = x.astype(jnp.bfloat16)
    xp = jnp.pad(xb, ((0, 0), (padding, padding), (padding, padding), (0, 0)))
    cols = []
    for kh in range(KH):
        for kw in range(KW):
            cols.append(xp[:, kh:kh + stride * (Ho - 1) + 1:stride,
                           kw:kw + stride * (Wo - 1) + 1:stride, :])
    patches = cols[0] if len(cols) == 1 else jnp.concatenate(cols, axis=-1)
    a = patches.reshape(B * Ho * Wo, KH * KW * Cin)
    bmat = w.reshape(KH * KW * Cin, Cout)
    res2 = None if residual is None else residual.reshape(B * Ho * Wo, Cout)
    out = pallas_matmul(a, bmat, bias, res2, relu=relu)
    return out.reshape(B, Ho, Wo, Cout)


@functools.partial(jax.jit, static_argnames=("stride",))
def grouped_conv3x3(x, w_slabs, bias_g, *, stride):
    """groups=32 3x3 conv as ONE fused pallas_call with a slab grid axis:
    width/128 independent 128-channel slabs (block-diagonal weights inside
    each slab), bias+ReLU fused."""
    B, H, W, width = x.shape
    n_slabs = width // 128
    Ho = (H + 2 - 3) // stride + 1
    Wo = (W + 2 - 3) // stride + 1
    M = B * Ho * Wo
    Kp = 9 * 128
    xp = jnp.pad(x.astype(jnp.bfloat16), ((0, 0), (1, 1), (1, 1), (0, 0)))
    taps = []
    for kh in range(3):
        for kw in range(3):
            taps.append(xp[:, kh:kh + stride * (Ho - 1) + 1:stride,
                           kw:kw + stride * (Wo - 1) + 1:stride, :])
    t = jnp.stack(taps, axis=3).reshape(B, Ho, Wo, 9, n_slabs, 128)
    patches = jnp.transpose(t, (4, 0, 1, 2, 3, 5)).reshape(n_slabs, M, Kp)
    tm, Mp = _pick_tile(M)
    patches = jnp.pad(patches, ((0, 0), (0, Mp - M), (0, 0)))
    out = _gconv_call(n_slabs, Mp, Kp, tm)(patches, w_slabs, bias_g)
    return out[:M].reshape(B, Ho, Wo, width)


@jax.jit
def maxpool_3x3_s2_p1(x):
    B, H, W, C = x.shape
    Ho = (H + 2 - 3) // 2 + 1
    Wo = (W + 2 - 3) // 2 + 1
    xp = jnp.pad(x.astype(jnp.bfloat16), ((0, 0), (1, 1), (1, 1), (0, 0)),
                 constant_values=-jnp.inf)
    M = B * Ho * Wo
    taps = []
    for kh in range(3):
        for kw in range(3):
            taps.append(xp[:, kh:kh + 2 * (Ho - 1) + 1:2,
                           kw:kw + 2 * (Wo - 1) + 1:2, :].reshape(M, C))
    # pack narrow channel counts into 128-wide lanes for unmasked stores
    if C < 128 and (M * C) % 128 == 0:
        R, Cc = (M * C) // 128, 128
    else:
        R, Cc = M, C
    tm, Rp = _pick_tile(R)
    taps = [jnp.pad(t.reshape(R, Cc), ((0, Rp - R), (0, 0))) for t in taps]
    out = _max9_call(Rp, Cc, tm)(*taps)              # tiled Pallas max reduction
    return out[:R].reshape(M, C).reshape(B, Ho, Wo, C)


@jax.jit
def adaptive_avgpool1(x):
    B, H, W, C = x.shape
    xr = x.reshape(B, H * W, C)
    if C % 512 == 0:
        tc = 512
    elif C % 256 == 0:
        tc = 256
    elif C % 128 == 0:
        tc = 128
    else:
        tc = C
    return _mean_call(B, H * W, C, tc)(xr)           # tiled Pallas mean (f32 out)


def bottleneck(x, blk):
    s = blk['s']
    out = conv2d(x, blk['w1'], blk['b1'], stride=1, padding=0, relu=True)
    out = grouped_conv3x3(out, blk['w2'], blk['b2g'], stride=s)
    if 'wd' in blk:
        identity = conv2d(x, blk['wd'], blk['bd'], stride=s, padding=0, relu=False)
    else:
        identity = x
    # residual add + ReLU fused into the w3 matmul epilogue (bf16 residual)
    return conv2d(out, blk['w3'], blk['b3'], residual=identity,
                  stride=1, padding=0, relu=True)


def resnext_features(params, x):
    f = conv2d(x, params['conv1_w'], params['conv1_b'],
               stride=2, padding=3, relu=True)
    f = maxpool_3x3_s2_p1(f)
    for blocks in params['layers']:
        for blk in blocks:
            f = bottleneck(f, blk)
    return f                                         # (B*S, H/32, W/32, 2048) bf16


def lstm_forward(x, w_ih_t, w_hh_t):
    """Matches torch nn.LSTM(2048, 2048, 1, bias=False), batch_first=False:
    dim0 of x is time, dim1 is batch (exactly as the original module calls it)."""
    T, Lb, In = x.shape
    Hd = w_hh_t.shape[0]
    zero_b = jnp.zeros((4 * Hd,), jnp.float32)
    ih = pallas_matmul(x.reshape(T * Lb, In), w_ih_t, zero_b,
                       out_dtype=jnp.float32).reshape(T, Lb, 4 * Hd)
    Lbp = _ceil_to(max(Lb, 8), 8)
    ih_p = jnp.pad(ih, ((0, 0), (0, Lbp - Lb), (0, 0)))
    out = _lstm_seq_call(T, Lbp, Hd)(ih_p, w_hh_t)   # single weight-resident kernel
    return out[:, :Lb, :]                            # (T, Lb, Hd)


def model_forward(params, x):
    """x: (batch, seq, c, h, w) float32 (NCHW per frame, like the PyTorch module)."""
    B, S, C, H, W = x.shape
    xf = x.reshape(B * S, C, H, W)
    x_nhwc = jnp.transpose(xf, (0, 2, 3, 1))         # to NHWC for the kernels
    f = resnext_features(params, x_nhwc)             # (B*S, H/32, W/32, 2048) bf16
    fmap = jnp.transpose(f, (0, 3, 1, 2)).astype(jnp.float32)   # NCHW f32 fmap
    pooled = adaptive_avgpool1(f)                    # (B*S, 2048) f32
    xs = pooled.reshape(B, S, 2048)
    x_lstm = lstm_forward(xs, params['w_ih_t'], params['w_hh_t'])  # (B, S, 2048)
    feat = x_lstm[:, -1, :]                          # (B, 2048)
    # classifier head is a tiny (B x 2) GEMM -> plain XLA dot, no Pallas padding
    logits = jnp.dot(feat, params['lin_w_t']) + params['lin_b'][None, :]
    # Dropout(0.4) -> identity (eval mode).
    return fmap, logits


# -----------------------------------------------------------------------------
# Deterministic parameter construction (ResNeXt50_32x4d shapes, BN folded,
# weights pre-cast to bf16 / pre-transposed / pre-reshaped for the kernels)
# -----------------------------------------------------------------------------
def init_params(key, num_classes):
    keys = iter(jax.random.split(key, 160))

    def nrm(shape, std):
        return std * jax.random.normal(next(keys), shape, dtype=jnp.float32)

    def bf(x):
        return x.astype(jnp.bfloat16)

    p = {
        'conv1_w': bf(nrm((7, 7, 3, 64), (2.0 / (7 * 7 * 3)) ** 0.5)),
        'conv1_b': jnp.zeros((64,), jnp.float32),    # BN(eval) folded -> bias
    }
    layers = []
    inplanes = 64
    groups, base_width = 32, 4
    for planes, nblocks, stride in [(64, 3, 1), (128, 4, 2), (256, 6, 2), (512, 3, 2)]:
        width = (planes * base_width // 64) * groups   # 128 / 256 / 512 / 1024
        outp = planes * 4
        cg = width // groups                           # channels per group
        n_slabs = width // 128                         # 1 / 2 / 4 / 8
        # groups=32 == per-128-channel slab conv with block-diagonal weights:
        mask128 = (jnp.arange(128)[:, None] // cg ==
                   jnp.arange(128)[None, :] // cg).astype(jnp.float32)
        blocks = []
        for b in range(nblocks):
            s = stride if b == 0 else 1
            w2 = (nrm((n_slabs, 3, 3, 128, 128), (2.0 / (9 * cg)) ** 0.5)
                  * mask128[None, None, None])
            blk = {
                's': s,
                'w1': bf(nrm((1, 1, inplanes, width), (2.0 / inplanes) ** 0.5)),
                'b1': jnp.zeros((width,), jnp.float32),
                'w2': bf(w2.reshape(n_slabs, 9 * 128, 128)),
                'b2g': jnp.zeros((n_slabs, 1, 128), jnp.float32),
                'w3': bf(nrm((1, 1, width, outp), 0.1 * (2.0 / width) ** 0.5)),
                'b3': jnp.zeros((outp,), jnp.float32),
            }
            if b == 0:   # downsample branch (1x1 conv + folded BN)
                blk['wd'] = bf(nrm((1, 1, inplanes, outp), (1.0 / inplanes) ** 0.5))
                blk['bd'] = jnp.zeros((outp,), jnp.float32)
            blocks.append(blk)
            inplanes = outp
        layers.append(blocks)
    p['layers'] = layers

    Hd = 2048
    w_ih = nrm((4 * Hd, Hd), Hd ** -0.5)             # LSTM weight_ih_l0 (no bias)
    w_hh = nrm((4 * Hd, Hd), Hd ** -0.5)             # LSTM weight_hh_l0 (no bias)
    p['w_ih_t'] = bf(w_ih.T)                         # (2048, 8192) bf16, gates i,f,g,o
    p['w_hh_t'] = bf(w_hh.T)                         # (2048, 8192) bf16, gates i,f,g,o
    p['lin_w_t'] = nrm((num_classes, Hd), Hd ** -0.5).T       # (2048, classes)
    p['lin_b'] = jnp.zeros((num_classes,), jnp.float32)
    return p


# -----------------------------------------------------------------------------
if __name__ == "__main__":
    key = jax.random.PRNGKey(0)
    pkey, xkey = jax.random.split(key)

    num_classes = 2
    B, S, C, H, W = 2, 3, 3, 64, 64                  # small, /32-friendly spatial
    params = init_params(pkey, num_classes)
    x = jax.random.normal(xkey, (B, S, C, H, W), dtype=jnp.float32)

    fmap, logits = model_forward(params, x)
    jax.block_until_ready((fmap, logits))

    assert fmap.shape == (B * S, 2048, H // 32, W // 32), fmap.shape
    assert logits.shape == (B, num_classes), logits.shape
    assert bool(jnp.all(jnp.isfinite(logits))) and bool(jnp.all(jnp.isfinite(fmap)))
    print("KERNEL_OK")
</pallas_src>

<mosaic_0001>
module attributes {stable_mosaic.version = 11 : i64} {
  func.func @_mm_kernel(%arg0: i32, %arg1: i32, %arg2: i32, %arg3: memref<512x256xbf16, #tpu.memory_space<vmem>>, %arg4: memref<256x128xbf16, #tpu.memory_space<vmem>>, %arg5: memref<1x128xf32, #tpu.memory_space<vmem>>, %arg6: memref<512x128xbf16, #tpu.memory_space<vmem>>, %arg7: memref<512x128xf32, #tpu.memory_space<vmem>>) attributes {dimension_semantics = [#tpu.dimension_semantics<parallel>, #tpu.dimension_semantics<parallel>, #tpu.dimension_semantics<arbitrary>], iteration_bounds = array<i64: 12, 1, 1>, scalar_prefetch = 0 : i64, scratch_operands = 1 : i64, tpu.core_type = #tpu.core_type<tc>, window_params = [{transform_indices = @transform_0, window_bounds = array<i64: 512, 256>}, {transform_indices = @transform_1, window_bounds = array<i64: 256, 128>}, {transform_indices = @transform_2, window_bounds = array<i64: 1, 128>}, {transform_indices = @transform_3, window_bounds = array<i64: 512, 128>}]} {
    %c0_i32 = arith.constant 0 : i32
    %0 = arith.cmpi eq, %arg2, %c0_i32 : i32
    %1 = arith.extui %0 : i1 to i32
    %c0_i32_0 = arith.constant 0 : i32
    %2 = arith.cmpi ne, %1, %c0_i32_0 : i32
    scf.if %2 {
      %cst_10 = arith.constant 0.000000e+00 : f32
      %12 = vector.broadcast %cst_10 : f32 to vector<512x128xf32>
      %c0_11 = arith.constant 0 : index
      %c0_12 = arith.constant 0 : index
      %13 = vector.load %arg7[%c0_11, %c0_12] : memref<512x128xf32, #tpu.memory_space<vmem>>, vector<512x128xf32>
      tpu.vector_store %arg7[%c0_11, %c0_12], %12 {strides = array<i32>} : memref<512x128xf32, #tpu.memory_space<vmem>>, vector<512x128xf32>,
    } else {
    }
    %c0 = arith.constant 0 : index
    %c0_1 = arith.constant 0 : index
    %3 = vector.load %arg7[%c0, %c0_1] : memref<512x128xf32, #tpu.memory_space<vmem>>, vector<512x128xf32>
    %c0_2 = arith.constant 0 : index
    %c0_3 = arith.constant 0 : index
    %4 = vector.load %arg3[%c0_2, %c0_3] : memref<512x256xbf16, #tpu.memory_space<vmem>>, vector<512x256xbf16>
    %c0_4 = arith.constant 0 : index
    %c0_5 = arith.constant 0 : index
    %5 = vector.load %arg4[%c0_4, %c0_5] : memref<256x128xbf16, #tpu.memory_space<vmem>>, vector<256x128xbf16>
    %cst = arith.constant dense<0.000000e+00> : vector<512x128xf32>
    %6 = tpu.matmul %4, %5, %cst {dimension_numbers = #tpu.dot_dimension_numbers<[1], [0], [0], [1], [0, 0, 1, 1], [], []>} : vector<512x256xbf16>, vector<256x128xbf16>, vector<512x128xf32> -> vector<512x128xf32>
    %7 = arith.addf %3, %6 : vector<512x128xf32>
    %c0_6 = arith.constant 0 : index
    %c0_7 = arith.constant 0 : index
    %8 = vector.load %arg7[%c0_6, %c0_7] : memref<512x128xf32, #tpu.memory_space<vmem>>, vector<512x128xf32>
    tpu.vector_store %arg7[%c0_6, %c0_7], %7 {strides = array<i32>} : memref<512x128xf32, #tpu.memory_space<vmem>>, vector<512x128xf32>,
    %c0_i32_8 = arith.constant 0 : i32
    %9 = arith.cmpi eq, %arg2, %c0_i32_8 : i32
    %10 = arith.extui %9 : i1 to i32
    %c0_i32_9 = arith.constant 0 : i32
    %11 = arith.cmpi ne, %10, %c0_i32_9 : i32
    scf.if %11 {
      %c0_10 = arith.constant 0 : index
      %c0_11 = arith.constant 0 : index
      %12 = vector.load %arg7[%c0_10, %c0_11] : memref<512x128xf32, #tpu.memory_space<vmem>>, vector<512x128xf32>
      %c0_12 = arith.constant 0 : index
      %c0_13 = arith.constant 0 : index
      %13 = vector.load %arg5[%c0_12, %c0_13] : memref<1x128xf32, #tpu.memory_space<vmem>>, vector<1x128xf32>
      %14 = vector.broadcast %13 : vector<1x128xf32> to vector<512x128xf32>
      %15 = arith.addf %12, %14 : vector<512x128xf32>
      %cst_14 = arith.constant 0.000000e+00 : f32
      %16 = vector.broadcast %cst_14 : f32 to vector<512x128xf32>
      %17 = arith.maximumf %15, %16 : vector<512x128xf32>
      %18 = arith.truncf %17 : vector<512x128xf32> to vector<512x128xbf16>
      %c0_15 = arith.constant 0 : index
      %c0_16 = arith.constant 0 : index
      %19 = vector.load %arg6[%c0_15, %c0_16] : memref<512x128xbf16, #tpu.memory_space<vmem>>, vector<512x128xbf16>
      tpu.vector_store %arg6[%c0_15, %c0_16], %18 {strides = array<i32>} : memref<512x128xbf16, #tpu.memory_space<vmem>>, vector<512x128xbf16>,
    } else {
    }
    return
  }
  func.func @transform_0(%arg0: i32, %arg1: i32, %arg2: i32) -> (i32, i32) {
    %c0_i32 = arith.constant 0 : i32
    return %arg0, %arg2 : i32, i32
  }
  func.func @transform_1(%arg0: i32, %arg1: i32, %arg2: i32) -> (i32, i32) {
    %c0_i32 = arith.constant 0 : i32
    return %arg2, %arg1 : i32, i32
  }
  func.func @transform_2(%arg0: i32, %arg1: i32, %arg2: i32) -> (i32, i32) {
    %c0_i32 = arith.constant 0 : i32
    %c0_i32_0 = arith.constant 0 : i32
    return %c0_i32, %arg1 : i32, i32
  }
  func.func @transform_3(%arg0: i32, %arg1: i32, %arg2: i32) -> (i32, i32) {
    %c0_i32 = arith.constant 0 : i32
    return %arg0, %arg1 : i32, i32
  }
}

</mosaic_0001>

<llo_original>
// kernel: tpu_custom_call.1
$region0: #{tpu_custom_call.1}
  #allocation0 [shape = 'u32[]', space=smem, size = 0x4, offset = 0x4, fixed_abs, tag = 'smem constant byte address 0x4 - core index']
  #allocation1 [shape = 'u32[144,128]{1,0:T(1,128)}', space=vmem, size = 0x12000, scoped, tag = 'internal scratch']
  #allocation2 [shape = 'f32[512,128]{1,0:T(8,128)}', space=vmem, size = 0x40000, scoped, tag = 'scratch operand']
  %s0 = inlined_call_operand.hbm [shape: bf16[6144,256], index: 0, kind: input, shape index: {}]
  %s1 = inlined_call_operand.hbm [shape: bf16[256,128], index: 1, kind: input, shape index: {}]
  %s2 = inlined_call_operand.hbm [shape: f32[1,128], index: 2, kind: input, shape index: {}]
  %s3 = inlined_call_operand.hbm [shape: bf16[6144,128], index: 3, kind: output, shape index: {}]
  %s4 = sld [smem:[#allocation0]]
  $region65: #{tpu_custom_call.1} parent=0
    _
  %s6 = ssub.s32 1, %s4
  %s7 = scalar_select 0, %s6, %s4
  $region1: #{tpu_custom_call.1} parent=0
    #allocation3 [shape = 'u8[524288]{0}', space=vmem, size = 0x80000, scoped, tag = 'input window, operand 0']
    #allocation4 [shape = 's32[2]{0}', space=sflag, size = 0x8, scoped, tag = 'scoped memory for tpu_custom_call.1']
    #allocation5 [shape = 's32[2]{0}', space=sflag, size = 0x8, scoped, tag = 'scoped memory for tpu_custom_call.1']
    #allocation6 [shape = 'u8[65536]{0}', space=vmem, size = 0x10000, scoped, tag = 'input window, operand 1, single buffered']
    #allocation7 [shape = 's32[1]{0}', space=sflag, size = 0x4, scoped, tag = 'scoped memory for tpu_custom_call.1']
    #allocation8 [shape = 'u8[512]{0}', space=vmem, size = 0x400, scoped, tag = 'input window, operand 2, single buffered']
    #allocation9 [shape = 'u8[262144]{0}', space=vmem, size = 0x40000, scoped, tag = 'output window, operand 0']
    %8 = vsyncpa [#allocation4], 0
    %s9 = scalar_lea.sflag [#allocation4], 1
    %10 = vsyncpa %s9, 0
    %11 = vsyncpa [#allocation7], 0
    %12 = vsyncpa [#allocation5], 0
    %s13 = scalar_lea.sflag [#allocation5], 1
    %14 = vsyncpa %s13, 0
    loop: start=0, step=1, limit=14
    $region2: #{tpu_custom_call.1} parent=1 // loop_pre_header
      _
    $region3: #{tpu_custom_call.1} parent=1 // loop_header
      %s16 = sphi 0, %s20
      %p17 = scmp.ge.s32.totalorder %s16, 14
      %s23 = sphi 0, %s42
      %s24 = sphi 0, %s38
      %s25 = sphi 0, %s34
      %s26 = sphi 0, %s23
      %s27 = sphi 0, %s24
      %s28 = sphi 0, %s25
      %s29 = sphi 0, %s26
      %s30 = sphi 0, %s27
      %s31 = sphi 0, %s28
      %s47 = sphi 0, %s49
      %s50 = sphi 0, %s47
      %s51 = sphi 0, %s50
      %s67 = sphi 0, %s51
      %s75 = sphi 0, %s77
      %s78 = sphi 0, %s75
      %s79 = sphi 0, %s78
      %s95 = sphi 0, %s79
      %s101 = sphi 0, %s103
      %s104 = sphi 0, %s101
      %s105 = sphi 0, %s104
      %s121 = sphi 0, %s105
      %s129 = sphi 0, %s131
      %s132 = sphi 0, %s129
      %s133 = sphi 0, %s132
      %s149 = sphi 0, %s133
    $region4: #{tpu_custom_call.1} parent=1 // loop_header_branch
      %19 = sbr.rel (%p17) target = $region8
    $region5: #{tpu_custom_call.1} parent=1 // loop_body
      %s21 = ssub.s32 %s16, 1
      %s22 = ssub.s32 %s16, 2
      %s32 = sadd.s32 1, %s25
      %p33 = scmp.ge.s32.totalorder %s32, 1
      %s34 = scalar_select %p33, 0, %s32
      %s35 = sadd.s32 1, %s24
      %s36 = scalar_select %p33, %s35, %s24
      %p37 = scmp.ge.s32.totalorder %s36, 1
      %s38 = scalar_select %p37, 0, %s36
      %s39 = sadd.s32 1, %s23
      %s40 = scalar_select %p37, %s39, %s23
      %p41 = scmp.ge.s32.totalorder %s40, 12
      %s42 = scalar_select %p41, 0, %s40
      %s43 = ssub.s32 %s23, %s42
      %s44 = ssub.s32 %s25, %s34
      %s45 = sor.u32 %s43, %s44
      %p46 = scmp.eq.s32.totalorder %s45, 0
      %s48 = sadd.s32 %s47, 1
      %s49 = scalar_select %p46, %s47, %s48
      %p52 = pneg %p46
      %p53 = scmp.eq.s32.totalorder %s16, 11
      %p54 = por %p52, %p53
      %p55 = scmp.ne.s32.totalorder %s47, %s50
      %p56 = scmp.eq.s32.totalorder %s16, 0
      %p57 = por %p55, %p56
      %p58 = scmp.ne.s32.totalorder %s47, %s50
      %p59 = scmp.eq.s32.totalorder %s21, 11
      %p60 = por %p58, %p59
      %p61 = scmp.ne.s32.totalorder %s50, %s51
      %p62 = scmp.eq.s32.totalorder %s21, 0
      %p63 = por %p61, %p62
      %p64 = scmp.ne.s32.totalorder %s50, %s51
      %p65 = scmp.eq.s32.totalorder %s22, 11
      %p66 = por %p64, %p65
      %p68 = scmp.ne.s32.totalorder %s51, %s67
      %p69 = scmp.eq.s32.totalorder %s22, 0
      %p70 = por %p68, %p69
      %s71 = ssub.s32 %s25, %s34
      %s72 = ssub.s32 %s24, %s38
      %s73 = sor.u32 %s71, %s72
      %p74 = scmp.eq.s32.totalorder %s73, 0
      %s76 = sadd.s32 %s75, 1
      %s77 = scalar_select %p74, %s75, %s76
      %p80 = pneg %p74
      %p81 = scmp.eq.s32.totalorder %s16, 11
      %p82 = por %p80, %p81
      %p83 = scmp.ne.s32.totalorder %s75, %s78
      %p84 = scmp.eq.s32.totalorder %s16, 0
      %p85 = por %p83, %p84
      %p86 = scmp.ne.s32.totalorder %s75, %s78
      %p87 = scmp.eq.s32.totalorder %s21, 11
      %p88 = por %p86, %p87
      %p89 = scmp.ne.s32.totalorder %s78, %s79
      %p90 = scmp.eq.s32.totalorder %s21, 0
      %p91 = por %p89, %p90
      %p92 = scmp.ne.s32.totalorder %s78, %s79
      %p93 = scmp.eq.s32.totalorder %s22, 11
      %p94 = por %p92, %p93
      %p96 = scmp.ne.s32.totalorder %s79, %s95
      %p97 = scmp.eq.s32.totalorder %s22, 0
      %p98 = por %p96, %p97
      %s99 = ssub.s32 %s24, %s38
      %p100 = scmp.eq.s32.totalorder %s99, 0
      %s102 = sadd.s32 %s101, 1
      %s103 = scalar_select %p100, %s101, %s102
      %p106 = pneg %p100
      %p107 = scmp.eq.s32.totalorder %s16, 11
      %p108 = por %p106, %p107
      %p109 = scmp.ne.s32.totalorder %s101, %s104
      %p110 = scmp.eq.s32.totalorder %s16, 0
      %p111 = por %p109, %p110
      %p112 = scmp.ne.s32.totalorder %s101, %s104
      %p113 = scmp.eq.s32.totalorder %s21, 11
      %p114 = por %p112, %p113
      %p115 = scmp.ne.s32.totalorder %s104, %s105
      %p116 = scmp.eq.s32.totalorder %s21, 0
      %p117 = por %p115, %p116
      %p118 = scmp.ne.s32.totalorder %s104, %s105
      %p119 = scmp.eq.s32.totalorder %s22, 11
      %p120 = por %p118, %p119
      %p122 = scmp.ne.s32.totalorder %s105, %s121
      %p123 = scmp.eq.s32.totalorder %s22, 0
      %p124 = por %p122, %p123
      %s125 = ssub.s32 %s23, %s42
      %s126 = ssub.s32 %s24, %s38
      %s127 = sor.u32 %s125, %s126
      %p128 = scmp.eq.s32.totalorder %s127, 0
      %s130 = sadd.s32 %s129, 1
      %s131 = scalar_select %p128, %s129, %s130
      %p134 = pneg %p128
      %p135 = scmp.eq.s32.totalorder %s16, 11
      %p136 = por %p134, %p135
      %p137 = scmp.ne.s32.totalorder %s129, %s132
      %p138 = scmp.eq.s32.totalorder %s16, 0
      %p139 = por %p137, %p138
      %p140 = scmp.ne.s32.totalorder %s129, %s132
      %p141 = scmp.eq.s32.totalorder %s21, 11
      %p142 = por %p140, %p141
      %p143 = scmp.ne.s32.totalorder %s132, %s133
      %p144 = scmp.eq.s32.totalorder %s21, 0
      %p145 = por %p143, %p144
      %p146 = scmp.ne.s32.totalorder %s132, %s133
      %p147 = scmp.eq.s32.totalorder %s22, 11
      %p148 = por %p146, %p147
      %p150 = scmp.ne.s32.totalorder %s133, %s149
      %p151 = scmp.eq.s32.totalorder %s22, 0
      %p152 = por %p150, %p151
      %p153 = scmp.le.s32.totalorder 1, %s16
      %p154 = scmp.lt.s32.totalorder %s16, 13
      %p155 = pnand %p153, %p154
      %p156 = pneg %p155
      // Predicated region
      $region9: #{tpu_custom_call.1} parent=5 // pred_check
        _
      $region10: #{tpu_custom_call.1} parent=5 // pred_check_branch
        %158 = sbr.rel (%p155) target = $region12
      $region11: #{tpu_custom_call.1} parent=5 // pred_region
        %s159 = ssub.s32 %s16, 1
        // Predicated region
        $region13: #{tpu_custom_call.1} parent=11 // pred_check
          %p160 = pneg %p91
        $region14: #{tpu_custom_call.1} parent=11 // pred_check_branch
          %162 = sbr.rel (%p160) target = $region16
        $region15: #{tpu_custom_call.1} parent=11 // pred_region
          %s163 = smul.u32 32, %s28
          %s165 = ssub.s32 2048, 2048
          %166 = vsyncadd [#allocation7], %s165
          %s167 = sadd.s32 %s27, %s163
          %s168 = smul.addr %s167, 64
          %s169 = scalar_lea.hbm %s1, %s168
          %s170 = sshll.u32 [#allocation6], 4
          %s171 = int_to_ptr.vmem [resolvable:$true] %s170
          %176 = dma.hbm_to_vmem [thread:$0]  %s169, 2048, %s171, [#allocation7], 64, 64, 4
        $region16: #{tpu_custom_call.1} parent=11 // pred_fallthru
          _
        // Predicated region
        $region17: #{tpu_custom_call.1} parent=11 // pred_check
          %p177 = pneg %p117
        $region18: #{tpu_custom_call.1} parent=11 // pred_check_branch
          %179 = sbr.rel (%p177) target = $region20
        $region19: #{tpu_custom_call.1} parent=11 // pred_region
          %s181 = ssub.s32 16, 16
          %182 = vsyncadd [#allocation7], %s181
          %s183 = smul.addr %s27, 16
          %s184 = scalar_lea.hbm %s2, %s183
          %s186 = sshll.u32 [#allocation8], 4
          %s187 = int_to_ptr.vmem [resolvable:$true] %s186
          %189 = dma.hbm_to_vmem [thread:$0]  %s184, 16, %s187, [#allocation7]
        $region20: #{tpu_custom_call.1} parent=11 // pred_fallthru
          _
      $region12: #{tpu_custom_call.1} parent=5 // pred_fallthru
        _
      %p190 = scmp.lt.s32.totalorder %s16, 12
      // Predicated region
      $region21: #{tpu_custom_call.1} parent=5 // pred_check
        %p191 = pneg %p190
      $region22: #{tpu_custom_call.1} parent=5 // pred_check_branch
        %193 = sbr.rel (%p191) target = $region24
      $region23: #{tpu_custom_call.1} parent=5 // pred_region
        // Predicated region
        $region25: #{tpu_custom_call.1} parent=23 // pred_check
          %p194 = pneg %p57
        $region26: #{tpu_custom_call.1} parent=23 // pred_check_branch
          %196 = sbr.rel (%p194) target = $region28
        $region27: #{tpu_custom_call.1} parent=23 // pred_region
          %s197 = sand.u32 %s47, 1
          %s198 = scalar_lea.sflag [#allocation4], %s197
          %s199 = sand.u32 %s47, 1
          %s200 = smul.addr %s199, 512
          %s201 = scalar_lea.vmem [#allocation3], %s200
          %s202 = smul.u32 64, %s23
          %s203 = smul.u32 2, %s25
          %s205 = ssub.s32 8192, 8192
          %206 = vsyncadd %s198, %s205
          %s207 = smul.addr %s202, 2
          %s208 = sadd.s32 %s203, %s207
          %s209 = smul.addr %s208, 64
          %s210 = scalar_lea.hbm %s0, %s209
          %s211 = sshll.u32 %s201, 4
          %s212 = int_to_ptr.vmem [resolvable:$true] %s211
          %217 = dma.hbm_to_vmem [thread:$0]  %s210, 8192, %s212, %s198, 128, 128, 8
        $region28: #{tpu_custom_call.1} parent=23 // pred_fallthru
          _
      $region24: #{tpu_custom_call.1} parent=5 // pred_fallthru
        _
      %p218 = scmp.le.s32.totalorder 1, %s16
      %p219 = scmp.lt.s32.totalorder %s16, 13
      %p220 = pnand %p218, %p219
      %p221 = pneg %p220
      // Predicated region
      $region29: #{tpu_custom_call.1} parent=5 // pred_check
        _
      $region30: #{tpu_custom_call.1} parent=5 // pred_check_branch
        %223 = sbr.rel (%p220) target = $region32
      $region31: #{tpu_custom_call.1} parent=5 // pred_region
        %s224 = ssub.s32 %s16, 1
        %s225 = sand.u32 %s50, 1
        %s226 = scalar_lea.sflag [#allocation4], %s225
        %s227 = sand.u32 %s50, 1
        %s228 = smul.addr %s227, 512
        %s229 = scalar_lea.vmem [#allocation3], %s228
        // Predicated region
        $region33: #{tpu_custom_call.1} parent=31 // pred_check
          %p230 = pneg %p63
        $region34: #{tpu_custom_call.1} parent=31 // pred_check_branch
          %232 = sbr.rel (%p230) target = $region36
        $region35: #{tpu_custom_call.1} parent=31 // pred_region
          %233 = dma.done %s226, 8192
        $region36: #{tpu_custom_call.1} parent=31 // pred_fallthru
          _
        // Predicated region
        $region37: #{tpu_custom_call.1} parent=31 // pred_check
          %p234 = pneg %p91
        $region38: #{tpu_custom_call.1} parent=31 // pred_check_branch
          %236 = sbr.rel (%p234) target = $region40
        $region39: #{tpu_custom_call.1} parent=31 // pred_region
          %237 = dma.done [#allocation7], 2048
        $region40: #{tpu_custom_call.1} parent=31 // pred_fallthru
          _
        // Predicated region
        $region41: #{tpu_custom_call.1} parent=31 // pred_check
          %p238 = pneg %p117
        $region42: #{tpu_custom_call.1} parent=31 // pred_check_branch
          %240 = sbr.rel (%p238) target = $region44
        $region43: #{tpu_custom_call.1} parent=31 // pred_region
          %241 = dma.done [#allocation7], 16
        $region44: #{tpu_custom_call.1} parent=31 // pred_fallthru
          _
        %s242 = sand.u32 %s50, 1
        %s243 = scalar_lea.sflag [#allocation4], %s242
        %s244 = sand.u32 %s50, 1
        %s245 = smul.addr %s244, 512
        %s246 = scalar_lea.vmem [#allocation3], %s245
        %p247 = pneg %p63
        %p248 = pneg %p60
        %p249 = pneg %p91
        %p250 = pneg %p88
        %p251 = pneg %p117
        %p252 = pneg %p114
        %p253 = pneg %p145
        %p254 = pneg %p142
        %s255 = sand.u32 %s132, 1
        %s256 = scalar_lea.sflag [#allocation5], %s255
        %s257 = sand.u32 %s132, 1
        %s258 = smul.addr %s257, 256
        %s259 = scalar_lea.vmem [#allocation9], %s258
        %s260 = smul.u32 64, %s26
        %s261 = smul.u32 2, %s28
        %s262 = smul.u32 32, %s28
        %s263 = smul.u32 64, %s26
        %p265 = scmp.eq.s32.totalorder %s28, 0
        // Predicated region
        $region45: #{tpu_custom_call.1} parent=31 // pred_check
          %p266 = pneg %p265
        $region46: #{tpu_custom_call.1} parent=31 // pred_check_branch
          %268 = sbr.rel (%p266) target = $region48
        $region47: #{tpu_custom_call.1} parent=31 // pred_region
          %269 = vst [vmem:[#allocation2] sm:$0xff] 0.0
          %270 = vst [vmem:[#allocation2 + $0x8] sm:$0xff] 0.0
          %271 = vst [vmem:[#allocation2 + $0x10] sm:$0xff] 0.0
          %272 = vst [vmem:[#allocation2 + $0x18] sm:$0xff] 0.0
          %273 = vst [vmem:[#allocation2 + $0x20] sm:$0xff] 0.0
          %274 = vst [vmem:[#allocation2 + $0x28] sm:$0xff] 0.0
          %275 = vst [vmem:[#allocation2 + $0x30] sm:$0xff] 0.0
          %276 = vst [vmem:[#allocation2 + $0x38] sm:$0xff] 0.0
          %277 = vst [vmem:[#allocation2 + $0x40] sm:$0xff] 0.0
          %278 = vst [vmem:[#allocation2 + $0x48] sm:$0xff] 0.0
          %279 = vst [vmem:[#allocation2 + $0x50] sm:$0xff] 0.0
          %280 = vst [vmem:[#allocation2 + $0x58] sm:$0xff] 0.0
          %281 = vst [vmem:[#allocation2 + $0x60] sm:$0xff] 0.0
          %282 = vst [vmem:[#allocation2 + $0x68] sm:$0xff] 0.0
          %283 = vst [vmem:[#allocation2 + $0x70] sm:$0xff] 0.0
          %284 = vst [vmem:[#allocation2 + $0x78] sm:$0xff] 0.0
          %285 = vst [vmem:[#allocation2 + $0x80] sm:$0xff] 0.0
          %286 = vst [vmem:[#allocation2 + $0x88] sm:$0xff] 0.0
          %287 = vst [vmem:[#allocation2 + $0x90] sm:$0xff] 0.0
          %288 = vst [vmem:[#allocation2 + $0x98] sm:$0xff] 0.0
          %289 = vst [vmem:[#allocation2 + $0xa0] sm:$0xff] 0.0
          %290 = vst [vmem:[#allocation2 + $0xa8] sm:$0xff] 0.0
          %291 = vst [vmem:[#allocation2 + $0xb0] sm:$0xff] 0.0
          %292 = vst [vmem:[#allocation2 + $0xb8] sm:$0xff] 0.0
          %293 = vst [vmem:[#allocation2 + $0xc0] sm:$0xff] 0.0
          %294 = vst [vmem:[#allocation2 + $0xc8] sm:$0xff] 0.0
          %295 = vst [vmem:[#allocation2 + $0xd0] sm:$0xff] 0.0
          %296 = vst [vmem:[#allocation2 + $0xd8] sm:$0xff] 0.0
          %297 = vst [vmem:[#allocation2 + $0xe0] sm:$0xff] 0.0
          %298 = vst [vmem:[#allocation2 + $0xe8] sm:$0xff] 0.0
          %299 = vst [vmem:[#allocation2 + $0xf0] sm:$0xff] 0.0
          %300 = vst [vmem:[#allocation2 + $0xf8] sm:$0xff] 0.0
          %301 = vst [vmem:[#allocation2 + $0x100] sm:$0xff] 0.0
          %302 = vst [vmem:[#allocation2 + $0x108] sm:$0xff] 0.0
          %303 = vst [vmem:[#allocation2 + $0x110] sm:$0xff] 0.0
          %304 = vst [vmem:[#allocation2 + $0x118] sm:$0xff] 0.0
          %305 = vst [vmem:[#allocation2 + $0x120] sm:$0xff] 0.0
          %306 = vst [vmem:[#allocation2 + $0x128] sm:$0xff] 0.0
          %307 = vst [vmem:[#allocation2 + $0x130] sm:$0xff] 0.0
          %308 = vst [vmem:[#allocation2 + $0x138] sm:$0xff] 0.0
          %309 = vst [vmem:[#allocation2 + $0x140] sm:$0xff] 0.0
          %310 = vst [vmem:[#allocation2 + $0x148] sm:$0xff] 0.0
          %311 = vst [vmem:[#allocation2 + $0x150] sm:$0xff] 0.0
          %312 = vst [vmem:[#allocation2 + $0x158] sm:$0xff] 0.0
          %313 = vst [vmem:[#allocation2 + $0x160] sm:$0xff] 0.0
          %314 = vst [vmem:[#allocation2 + $0x168] sm:$0xff] 0.0
          %315 = vst [vmem:[#allocation2 + $0x170] sm:$0xff] 0.0
          %316 = vst [vmem:[#allocation2 + $0x178] sm:$0xff] 0.0
          %317 = vst [vmem:[#allocation2 + $0x180] sm:$0xff] 0.0
          %318 = vst [vmem:[#allocation2 + $0x188] sm:$0xff] 0.0
          %319 = vst [vmem:[#allocation2 + $0x190] sm:$0xff] 0.0
          %320 = vst [vmem:[#allocation2 + $0x198] sm:$0xff] 0.0
          %321 = vst [vmem:[#allocation2 + $0x1a0] sm:$0xff] 0.0
          %322 = vst [vmem:[#allocation2 + $0x1a8] sm:$0xff] 0.0
          %323 = vst [vmem:[#allocation2 + $0x1b0] sm:$0xff] 0.0
          %324 = vst [vmem:[#allocation2 + $0x1b8] sm:$0xff] 0.0
          %325 = vst [vmem:[#allocation2 + $0x1c0] sm:$0xff] 0.0
          %326 = vst [vmem:[#allocation2 + $0x1c8] sm:$0xff] 0.0
          %327 = vst [vmem:[#allocation2 + $0x1d0] sm:$0xff] 0.0
          %328 = vst [vmem:[#allocation2 + $0x1d8] sm:$0xff] 0.0
          %329 = vst [vmem:[#allocation2 + $0x1e0] sm:$0xff] 0.0
          %330 = vst [vmem:[#allocation2 + $0x1e8] sm:$0xff] 0.0
          %331 = vst [vmem:[#allocation2 + $0x1f0] sm:$0xff] 0.0
          %332 = vst [vmem:[#allocation2 + $0x1f8] sm:$0xff] 0.0
        $region48: #{tpu_custom_call.1} parent=31 // pred_fallthru
          _
        %v333 = vld [vmem:[#allocation2] sm:$0xff]
        %v334 = vld [vmem:[#allocation2 + $0x8] sm:$0xff]
        %v335 = vld [vmem:[#allocation2 + $0x10] sm:$0xff]
        %v336 = vld [vmem:[#allocation2 + $0x18] sm:$0xff]
        %v337 = vld [vmem:[#allocation2 + $0x20] sm:$0xff]
        %v338 = vld [vmem:[#allocation2 + $0x28] sm:$0xff]
        %v339 = vld [vmem:[#allocation2 + $0x30] sm:$0xff]
        %v340 = vld [vmem:[#allocation2 + $0x38] sm:$0xff]
        %v341 = vld [vmem:[#allocation2 + $0x40] sm:$0xff]
        %v342 = vld [vmem:[#allocation2 + $0x48] sm:$0xff]
        %v343 = vld [vmem:[#allocation2 + $0x50] sm:$0xff]
        %v344 = vld [vmem:[#allocation2 + $0x58] sm:$0xff]
        %v345 = vld [vmem:[#allocation2 + $0x60] sm:$0xff]
        %v346 = vld [vmem:[#allocation2 + $0x68] sm:$0xff]
        %v347 = vld [vmem:[#allocation2 + $0x70] sm:$0xff]
        %v348 = vld [vmem:[#allocation2 + $0x78] sm:$0xff]
        %v349 = vld [vmem:[#allocation2 + $0x80] sm:$0xff]
        %v350 = vld [vmem:[#allocation2 + $0x88] sm:$0xff]
        %v351 = vld [vmem:[#allocation2 + $0x90] sm:$0xff]
        %v352 = vld [vmem:[#allocation2 + $0x98] sm:$0xff]
        %v353 = vld [vmem:[#allocation2 + $0xa0] sm:$0xff]
        %v354 = vld [vmem:[#allocation2 + $0xa8] sm:$0xff]
        %v355 = vld [vmem:[#allocation2 + $0xb0] sm:$0xff]
        %v356 = vld [vmem:[#allocation2 + $0xb8] sm:$0xff]
        %v357 = vld [vmem:[#allocation2 + $0xc0] sm:$0xff]
        %v358 = vld [vmem:[#allocation2 + $0xc8] sm:$0xff]
        %v359 = vld [vmem:[#allocation2 + $0xd0] sm:$0xff]
        %v360 = vld [vmem:[#allocation2 + $0xd8] sm:$0xff]
        %v361 = vld [vmem:[#allocation2 + $0xe0] sm:$0xff]
        %v362 = vld [vmem:[#allocation2 + $0xe8] sm:$0xff]
        %v363 = vld [vmem:[#allocation2 + $0xf0] sm:$0xff]
        %v364 = vld [vmem:[#allocation2 + $0xf8] sm:$0xff]
        %v365 = vld [vmem:[#allocation2 + $0x100] sm:$0xff]
        %v366 = vld [vmem:[#allocation2 + $0x108] sm:$0xff]
        %v367 = vld [vmem:[#allocation2 + $0x110] sm:$0xff]
        %v368 = vld [vmem:[#allocation2 + $0x118] sm:$0xff]
        %v369 = vld [vmem:[#allocation2 + $0x120] sm:$0xff]
        %v370 = vld [vmem:[#allocation2 + $0x128] sm:$0xff]
        %v371 = vld [vmem:[#allocation2 + $0x130] sm:$0xff]
        %v372 = vld [vmem:[#allocation2 + $0x138] sm:$0xff]
        %v373 = vld [vmem:[#allocation2 + $0x140] sm:$0xff]
        %v374 = vld [vmem:[#allocation2 + $0x148] sm:$0xff]
        %v375 = vld [vmem:[#allocation2 + $0x150] sm:$0xff]
        %v376 = vld [vmem:[#allocation2 + $0x158] sm:$0xff]
        %v377 = vld [vmem:[#allocation2 + $0x160] sm:$0xff]
        %v378 = vld [vmem:[#allocation2 + $0x168] sm:$0xff]
        %v379 = vld [vmem:[#allocation2 + $0x170] sm:$0xff]
        %v380 = vld [vmem:[#allocation2 + $0x178] sm:$0xff]
        %v381 = vld [vmem:[#allocation2 + $0x180] sm:$0xff]
        %v382 = vld [vmem:[#allocation2 + $0x188] sm:$0xff]
        %v383 = vld [vmem:[#allocation2 + $0x190] sm:$0xff]
        %v384 = vld [vmem:[#allocation2 + $0x198] sm:$0xff]
        %v385 = vld [vmem:[#allocation2 + $0x1a0] sm:$0xff]
        %v386 = vld [vmem:[#allocation2 + $0x1a8] sm:$0xff]
        %v387 = vld [vmem:[#allocation2 + $0x1b0] sm:$0xff]
        %v388 = vld [vmem:[#allocation2 + $0x1b8] sm:$0xff]
        %v389 = vld [vmem:[#allocation2 + $0x1c0] sm:$0xff]
        %v390 = vld [vmem:[#allocation2 + $0x1c8] sm:$0xff]
        %v391 = vld [vmem:[#allocation2 + $0x1d0] sm:$0xff]
        %v392 = vld [vmem:[#allocation2 + $0x1d8] sm:$0xff]
        %v393 = vld [vmem:[#allocation2 + $0x1e0] sm:$0xff]
        %v394 = vld [vmem:[#allocation2 + $0x1e8] sm:$0xff]
        %v395 = vld [vmem:[#allocation2 + $0x1f0] sm:$0xff]
        %v396 = vld [vmem:[#allocation2 + $0x1f8] sm:$0xff]
        %v397 = vld [vmem:[%s229] sm:$0xff]
        %v398 = vld [vmem:[%s229 + $0x8] sm:$0xff]
        %v399 = vld [vmem:[%s229 + $0x10] sm:$0xff]
        %v400 = vld [vmem:[%s229 + $0x18] sm:$0xff]
        %v401 = vld [vmem:[%s229 + $0x20] sm:$0xff]
        %v402 = vld [vmem:[%s229 + $0x28] sm:$0xff]
        %v403 = vld [vmem:[%s229 + $0x30] sm:$0xff]
        %v404 = vld [vmem:[%s229 + $0x38] sm:$0xff]
        %v405 = vld [vmem:[%s229 + $0x40] sm:$0xff]
        %v406 = vld [vmem:[%s229 + $0x48] sm:$0xff]
        %v407 = vld [vmem:[%s229 + $0x50] sm:$0xff]
        %v408 = vld [vmem:[%s229 + $0x58] sm:$0xff]
        %v409 = vld [vmem:[%s229 + $0x60] sm:$0xff]
        %v410 = vld [vmem:[%s229 + $0x68] sm:$0xff]
        %v411 = vld [vmem:[%s229 + $0x70] sm:$0xff]
        %v412 = vld [vmem:[%s229 + $0x78] sm:$0xff]
        %v413 = vld [vmem:[%s229 + $0x80] sm:$0xff]
        %v414 = vld [vmem:[%s229 + $0x88] sm:$0xff]
        %v415 = vld [vmem:[%s229 + $0x90] sm:$0xff]
        %v416 = vld [vmem:[%s229 + $0x98] sm:$0xff]
        %v417 = vld [vmem:[%s229 + $0xa0] sm:$0xff]
        %v418 = vld [vmem:[%s229 + $0xa8] sm:$0xff]
        %v419 = vld [vmem:[%s229 + $0xb0] sm:$0xff]
        %v420 = vld [vmem:[%s229 + $0xb8] sm:$0xff]
        %v421 = vld [vmem:[%s229 + $0xc0] sm:$0xff]
        %v422 = vld [vmem:[%s229 + $0xc8] sm:$0xff]
        %v423 = vld [vmem:[%s229 + $0xd0] sm:$0xff]
        %v424 = vld [vmem:[%s229 + $0xd8] sm:$0xff]
        %v425 = vld [vmem:[%s229 + $0xe0] sm:$0xff]
        %v426 = vld [vmem:[%s229 + $0xe8] sm:$0xff]
        %v427 = vld [vmem:[%s229 + $0xf0] sm:$0xff]
        %v428 = vld [vmem:[%s229 + $0xf8] sm:$0xff]
        %v429 = vld [vmem:[%s229 + $0x100] sm:$0xff]
        %v430 = vld [vmem:[%s229 + $0x108] sm:$0xff]
        %v431 = vld [vmem:[%s229 + $0x110] sm:$0xff]
        %v432 = vld [vmem:[%s229 + $0x118] sm:$0xff]
        %v433 = vld [vmem:[%s229 + $0x120] sm:$0xff]
        %v434 = vld [vmem:[%s229 + $0x128] sm:$0xff]
        %v435 = vld [vmem:[%s229 + $0x130] sm:$0xff]
        %v436 = vld [vmem:[%s229 + $0x138] sm:$0xff]
        %v437 = vld [vmem:[%s229 + $0x140] sm:$0xff]
        %v438 = vld [vmem:[%s229 + $0x148] sm:$0xff]
        %v439 = vld [vmem:[%s229 + $0x150] sm:$0xff]
        %v440 = vld [vmem:[%s229 + $0x158] sm:$0xff]
        %v441 = vld [vmem:[%s229 + $0x160] sm:$0xff]
        %v442 = vld [vmem:[%s229 + $0x168] sm:$0xff]
        %v443 = vld [vmem:[%s229 + $0x170] sm:$0xff]
        %v444 = vld [vmem:[%s229 + $0x178] sm:$0xff]
        %v445 = vld [vmem:[%s229 + $0x180] sm:$0xff]
        %v446 = vld [vmem:[%s229 + $0x188] sm:$0xff]
        %v447 = vld [vmem:[%s229 + $0x190] sm:$0xff]
        %v448 = vld [vmem:[%s229 + $0x198] sm:$0xff]
        %v449 = vld [vmem:[%s229 + $0x1a0] sm:$0xff]
        %v450 = vld [vmem:[%s229 + $0x1a8] sm:$0xff]
        %v451 = vld [vmem:[%s229 + $0x1b0] sm:$0xff]
        %v452 = vld [vmem:[%s229 + $0x1b8] sm:$0xff]
        %v453 = vld [vmem:[%s229 + $0x1c0] sm:$0xff]
        %v454 = vld [vmem:[%s229 + $0x1c8] sm:$0xff]
        %v455 = vld [vmem:[%s229 + $0x1d0] sm:$0xff]
        %v456 = vld [vmem:[%s229 + $0x1d8] sm:$0xff]
        %v457 = vld [vmem:[%s229 + $0x1e0] sm:$0xff]
        %v458 = vld [vmem:[%s229 + $0x1e8] sm:$0xff]
        %v459 = vld [vmem:[%s229 + $0x1f0] sm:$0xff]
        %v460 = vld [vmem:[%s229 + $0x1f8] sm:$0xff]
        %v461 = vld [vmem:[#allocation6] sm:$0xf]
        %v462 = vld [vmem:[#allocation6 + $0x4] sm:$0xf]
        %v463 = vld [vmem:[#allocation6 + $0x8] sm:$0xf]
        %v464 = vld [vmem:[#allocation6 + $0xc] sm:$0xf]
        %v465 = vld [vmem:[#allocation6 + $0x10] sm:$0xf]
        %v466 = vld [vmem:[#allocation6 + $0x14] sm:$0xf]
        %v467 = vld [vmem:[#allocation6 + $0x18] sm:$0xf]
        %v468 = vld [vmem:[#allocation6 + $0x1c] sm:$0xf]
        %v469 = vld [vmem:[#allocation6 + $0x20] sm:$0xf]
        %v470 = vld [vmem:[#allocation6 + $0x24] sm:$0xf]
        %v471 = vld [vmem:[#allocation6 + $0x28] sm:$0xf]
        %v472 = vld [vmem:[#allocation6 + $0x2c] sm:$0xf]
        %v473 = vld [vmem:[#allocation6 + $0x30] sm:$0xf]
        %v474 = vld [vmem:[#allocation6 + $0x34] sm:$0xf]
        %v475 = vld [vmem:[#allocation6 + $0x38] sm:$0xf]
        %v476 = vld [vmem:[#allocation6 + $0x3c] sm:$0xf]
        %v477 = vld [vmem:[#allocation6 + $0x40] sm:$0xf]
        %v478 = vld [vmem:[#allocation6 + $0x44] sm:$0xf]
        %v479 = vld [vmem:[#allocation6 + $0x48] sm:$0xf]
        %v480 = vld [vmem:[#allocation6 + $0x4c] sm:$0xf]
        %v481 = vld [vmem:[#allocation6 + $0x50] sm:$0xf]
        %v482 = vld [vmem:[#allocation6 + $0x54] sm:$0xf]
        %v483 = vld [vmem:[#allocation6 + $0x58] sm:$0xf]
        %v484 = vld [vmem:[#allocation6 + $0x5c] sm:$0xf]
        %v485 = vld [vmem:[#allocation6 + $0x60] sm:$0xf]
        %v486 = vld [vmem:[#allocation6 + $0x64] sm:$0xf]
        %v487 = vld [vmem:[#allocation6 + $0x68] sm:$0xf]
        %v488 = vld [vmem:[#allocation6 + $0x6c] sm:$0xf]
        %v489 = vld [vmem:[#allocation6 + $0x70] sm:$0xf]
        %v490 = vld [vmem:[#allocation6 + $0x74] sm:$0xf]
        %v491 = vld [vmem:[#allocation6 + $0x78] sm:$0xf]
        %v492 = vld [vmem:[#allocation6 + $0x7c] sm:$0xf]
        %v557 = vunpack.c.l.b16 %v397
        %v558 = vunpack.c.h.b16 %v397
        %v559 = vunpack.c.l.b16 %v398
        %v560 = vunpack.c.h.b16 %v398
        %v561 = vunpack.c.l.b16 %v399
        %v562 = vunpack.c.h.b16 %v399
        %v563 = vunpack.c.l.b16 %v400
        %v564 = vunpack.c.h.b16 %v400
        %v565 = vunpack.c.l.b16 %v401
        %v566 = vunpack.c.h.b16 %v401
        %v567 = vunpack.c.l.b16 %v402
        %v568 = vunpack.c.h.b16 %v402
        %v569 = vunpack.c.l.b16 %v403
        %v570 = vunpack.c.h.b16 %v403
        %v571 = vunpack.c.l.b16 %v404
        %v572 = vunpack.c.h.b16 %v404
        %v573 = vunpack.c.l.b16 %v405
        %v574 = vunpack.c.h.b16 %v405
        %v575 = vunpack.c.l.b16 %v406
        %v576 = vunpack.c.h.b16 %v406
        %v577 = vunpack.c.l.b16 %v407
        %v578 = vunpack.c.h.b16 %v407
        %v579 = vunpack.c.l.b16 %v408
        %v580 = vunpack.c.h.b16 %v408
        %v581 = vunpack.c.l.b16 %v409
        %v582 = vunpack.c.h.b16 %v409
        %v583 = vunpack.c.l.b16 %v410
        %v584 = vunpack.c.h.b16 %v410
        %v585 = vunpack.c.l.b16 %v411
        %v586 = vunpack.c.h.b16 %v411
        %v587 = vunpack.c.l.b16 %v412
        %v588 = vunpack.c.h.b16 %v412
        %v589 = vunpack.c.l.b16 %v413
        %v590 = vunpack.c.h.b16 %v413
        %v591 = vunpack.c.l.b16 %v414
        %v592 = vunpack.c.h.b16 %v414
        %v593 = vunpack.c.l.b16 %v415
        %v594 = vunpack.c.h.b16 %v415
        %v595 = vunpack.c.l.b16 %v416
        %v596 = vunpack.c.h.b16 %v416
        %v597 = vunpack.c.l.b16 %v417
        %v598 = vunpack.c.h.b16 %v417
        %v599 = vunpack.c.l.b16 %v418
        %v600 = vunpack.c.h.b16 %v418
        %v601 = vunpack.c.l.b16 %v419
        %v602 = vunpack.c.h.b16 %v419
        %v603 = vunpack.c.l.b16 %v420
        %v604 = vunpack.c.h.b16 %v420
        %v605 = vunpack.c.l.b16 %v421
        %v606 = vunpack.c.h.b16 %v421
        %v607 = vunpack.c.l.b16 %v422
        %v608 = vunpack.c.h.b16 %v422
        %v609 = vunpack.c.l.b16 %v423
        %v610 = vunpack.c.h.b16 %v423
        %v611 = vunpack.c.l.b16 %v424
        %v612 = vunpack.c.h.b16 %v424
        %v613 = vunpack.c.l.b16 %v425
        %v614 = vunpack.c.h.b16 %v425
        %v615 = vunpack.c.l.b16 %v426
        %v616 = vunpack.c.h.b16 %v426
        %v617 = vunpack.c.l.b16 %v427
        %v618 = vunpack.c.h.b16 %v427
        %v619 = vunpack.c.l.b16 %v428
        %v620 = vunpack.c.h.b16 %v428
        %v621 = vunpack.c.l.b16 %v429
        %v622 = vunpack.c.h.b16 %v429
        %v623 = vunpack.c.l.b16 %v430
        %v624 = vunpack.c.h.b16 %v430
        %v625 = vunpack.c.l.b16 %v431
        %v626 = vunpack.c.h.b16 %v431
        %v627 = vunpack.c.l.b16 %v432
        %v628 = vunpack.c.h.b16 %v432
        %v629 = vunpack.c.l.b16 %v433
        %v630 = vunpack.c.h.b16 %v433
        %v631 = vunpack.c.l.b16 %v434
        %v632 = vunpack.c.h.b16 %v434
        %v633 = vunpack.c.l.b16 %v435
        %v634 = vunpack.c.h.b16 %v435
        %v635 = vunpack.c.l.b16 %v436
        %v636 = vunpack.c.h.b16 %v436
        %v637 = vunpack.c.l.b16 %v437
        %v638 = vunpack.c.h.b16 %v437
        %v639 = vunpack.c.l.b16 %v438
        %v640 = vunpack.c.h.b16 %v438
        %v641 = vunpack.c.l.b16 %v439
        %v642 = vunpack.c.h.b16 %v439
        %v643 = vunpack.c.l.b16 %v440
        %v644 = vunpack.c.h.b16 %v440
        %v645 = vunpack.c.l.b16 %v441
        %v646 = vunpack.c.h.b16 %v441
        %v647 = vunpack.c.l.b16 %v442
        %v648 = vunpack.c.h.b16 %v442
        %v649 = vunpack.c.l.b16 %v443
        %v650 = vunpack.c.h.b16 %v443
        %v651 = vunpack.c.l.b16 %v444
        %v652 = vunpack.c.h.b16 %v444
        %v653 = vunpack.c.l.b16 %v445
        %v654 = vunpack.c.h.b16 %v445
        %v655 = vunpack.c.l.b16 %v446
        %v656 = vunpack.c.h.b16 %v446
        %v657 = vunpack.c.l.b16 %v447
        %v658 = vunpack.c.h.b16 %v447
        %v659 = vunpack.c.l.b16 %v448
        %v660 = vunpack.c.h.b16 %v448
        %v661 = vunpack.c.l.b16 %v449
        %v662 = vunpack.c.h.b16 %v449
        %v663 = vunpack.c.l.b16 %v450
        %v664 = vunpack.c.h.b16 %v450
        %v665 = vunpack.c.l.b16 %v451
        %v666 = vunpack.c.h.b16 %v451
        %v667 = vunpack.c.l.b16 %v452
        %v668 = vunpack.c.h.b16 %v452
        %v669 = vunpack.c.l.b16 %v453
        %v670 = vunpack.c.h.b16 %v453
        %v671 = vunpack.c.l.b16 %v454
        %v672 = vunpack.c.h.b16 %v454
        %v673 = vunpack.c.l.b16 %v455
        %v674 = vunpack.c.h.b16 %v455
        %v675 = vunpack.c.l.b16 %v456
        %v676 = vunpack.c.h.b16 %v456
        %v677 = vunpack.c.l.b16 %v457
        %v678 = vunpack.c.h.b16 %v457
        %v679 = vunpack.c.l.b16 %v458
        %v680 = vunpack.c.h.b16 %v458
        %v681 = vunpack.c.l.b16 %v459
        %v682 = vunpack.c.h.b16 %v459
        %v683 = vunpack.c.l.b16 %v460
        %v684 = vunpack.c.h.b16 %v460
        %v685 = vpack.c.b16 %v559, %v557
        %v686 = vpack.c.b16 %v560, %v558
        %v687 = vpack.c.b16 %v563, %v561
        %v688 = vpack.c.b16 %v564, %v562
        %v689 = vpack.c.b16 %v567, %v565
        %v690 = vpack.c.b16 %v568, %v566
        %v691 = vpack.c.b16 %v571, %v569
        %v692 = vpack.c.b16 %v572, %v570
        %v693 = vpack.c.b16 %v575, %v573
        %v694 = vpack.c.b16 %v576, %v574
        %v695 = vpack.c.b16 %v579, %v577
        %v696 = vpack.c.b16 %v580, %v578
        %v697 = vpack.c.b16 %v583, %v581
        %v698 = vpack.c.b16 %v584, %v582
        %v699 = vpack.c.b16 %v587, %v585
        %v700 = vpack.c.b16 %v588, %v586
        %v701 = vpack.c.b16 %v591, %v589
        %v702 = vpack.c.b16 %v592, %v590
        %v703 = vpack.c.b16 %v595, %v593
        %v704 = vpack.c.b16 %v596, %v594
        %v705 = vpack.c.b16 %v599, %v597
        %v706 = vpack.c.b16 %v600, %v598
        %v707 = vpack.c.b16 %v603, %v601
        %v708 = vpack.c.b16 %v604, %v602
        %v709 = vpack.c.b16 %v607, %v605
        %v710 = vpack.c.b16 %v608, %v606
        %v711 = vpack.c.b16 %v611, %v609
        %v712 = vpack.c.b16 %v612, %v610
        %v713 = vpack.c.b16 %v615, %v613
        %v714 = vpack.c.b16 %v616, %v614
        %v715 = vpack.c.b16 %v619, %v617
        %v716 = vpack.c.b16 %v620, %v618
        %v717 = vpack.c.b16 %v623, %v621
        %v718 = vpack.c.b16 %v624, %v622
        %v719 = vpack.c.b16 %v627, %v625
        %v720 = vpack.c.b16 %v628, %v626
        %v721 = vpack.c.b16 %v631, %v629
        %v722 = vpack.c.b16 %v632, %v630
        %v723 = vpack.c.b16 %v635, %v633
        %v724 = vpack.c.b16 %v636, %v634
        %v725 = vpack.c.b16 %v639, %v637
        %v726 = vpack.c.b16 %v640, %v638
        %v727 = vpack.c.b16 %v643, %v641
        %v728 = vpack.c.b16 %v644, %v642
        %v729 = vpack.c.b16 %v647, %v645
        %v730 = vpack.c.b16 %v648, %v646
        %v731 = vpack.c.b16 %v651, %v649
        %v732 = vpack.c.b16 %v652, %v650
        %v733 = vpack.c.b16 %v655, %v653
        %v734 = vpack.c.b16 %v656, %v654
        %v735 = vpack.c.b16 %v659, %v657
        %v736 = vpack.c.b16 %v660, %v658
        %v737 = vpack.c.b16 %v663, %v661
        %v738 = vpack.c.b16 %v664, %v662
        %v739 = vpack.c.b16 %v667, %v665
        %v740 = vpack.c.b16 %v668, %v666
        %v741 = vpack.c.b16 %v671, %v669
        %v742 = vpack.c.b16 %v672, %v670
        %v743 = vpack.c.b16 %v675, %v673
        %v744 = vpack.c.b16 %v676, %v674
        %v745 = vpack.c.b16 %v679, %v677
        %v746 = vpack.c.b16 %v680, %v678
        %v747 = vpack.c.b16 %v683, %v681
        %v748 = vpack.c.b16 %v684, %v682
        %v845 = vunpack.c.l.b16 %v461
        %v846 = vunpack.c.l.b16 %v462
        %v847 = vunpack.c.l.b16 %v463
        %v848 = vunpack.c.l.b16 %v464
        %v849 = vunpack.c.l.b16 %v465
        %v850 = vunpack.c.l.b16 %v466
        %v851 = vunpack.c.l.b16 %v467
        %v852 = vunpack.c.l.b16 %v468
        %v853 = vunpack.c.l.b16 %v469
        %v854 = vunpack.c.l.b16 %v470
        %v855 = vunpack.c.l.b16 %v471
        %v856 = vunpack.c.l.b16 %v472
        %v857 = vunpack.c.l.b16 %v473
        %v858 = vunpack.c.l.b16 %v474
        %v859 = vunpack.c.l.b16 %v475
        %v860 = vunpack.c.l.b16 %v476
        %v861 = vunpack.c.l.b16 %v477
        %v862 = vunpack.c.l.b16 %v478
        %v863 = vunpack.c.l.b16 %v479
        %v864 = vunpack.c.l.b16 %v480
        %v865 = vunpack.c.l.b16 %v481
        %v866 = vunpack.c.l.b16 %v482
        %v867 = vunpack.c.l.b16 %v483
        %v868 = vunpack.c.l.b16 %v484
        %v869 = vunpack.c.l.b16 %v485
        %v870 = vunpack.c.l.b16 %v486
        %v871 = vunpack.c.l.b16 %v487
        %v872 = vunpack.c.l.b16 %v488
        %v873 = vunpack.c.l.b16 %v489
        %v874 = vunpack.c.l.b16 %v490
        %v875 = vunpack.c.l.b16 %v491
        %v876 = vunpack.c.l.b16 %v492
        %v877 = vpack.c.b16 %v846, %v845
        %v878 = vpack.c.b16 %v848, %v847
        %v879 = vpack.c.b16 %v850, %v849
        %v880 = vpack.c.b16 %v852, %v851
        %v881 = vpack.c.b16 %v854, %v853
        %v882 = vpack.c.b16 %v856, %v855
        %v883 = vpack.c.b16 %v858, %v857
        %v884 = vpack.c.b16 %v860, %v859
        %v885 = vpack.c.b16 %v862, %v861
        %v886 = vpack.c.b16 %v864, %v863
        %v887 = vpack.c.b16 %v866, %v865
        %v888 = vpack.c.b16 %v868, %v867
        %v889 = vpack.c.b16 %v870, %v869
        %v890 = vpack.c.b16 %v872, %v871
        %v891 = vpack.c.b16 %v874, %v873
        %v892 = vpack.c.b16 %v876, %v875
        %909 = vmatprep.subr.bf16.mxu0 0
        %910 = vmatpush1.bf16.msra.mxu0 %v884
        %911 = vmatprep.subr.bf16.mxu0 0
        %912 = vmatpush1.bf16.msra.mxu0 %v883
        %913 = vmatprep.subr.bf16.mxu0 0
        %914 = vmatpush1.bf16.msra.mxu0 %v882
        %915 = vmatprep.subr.bf16.mxu0 0
        %916 = vmatpush1.bf16.msra.mxu0 %v881
        %917 = vmatprep.subr.bf16.mxu0 0
        %918 = vmatpush1.bf16.msra.mxu0 %v880
        %919 = vmatprep.subr.bf16.mxu0 0
        %920 = vmatpush1.bf16.msra.mxu0 %v879
        %921 = vmatprep.subr.bf16.mxu0 0
        %922 = vmatpush1.bf16.msra.mxu0 %v878
        %923 = vmatprep.subr.bf16.mxu0 0
        %924 = vmatpush1.bf16.msra.mxu0 %v877
        %925 = vmatprep.subr.bf16.mxu0 0
        %926 = vmatpush2.bf16.msra.mxu0 %v892
        %927 = vmatprep.subr.bf16.mxu0 0
        %928 = vmatpush2.bf16.msra.mxu0 %v891
        %929 = vmatprep.subr.bf16.mxu0 0
        %930 = vmatpush2.bf16.msra.mxu0 %v890
        %931 = vmatprep.subr.bf16.mxu0 0
        %932 = vmatpush2.bf16.msra.mxu0 %v889
        %933 = vmatprep.subr.bf16.mxu0 0
        %934 = vmatpush2.bf16.msra.mxu0 %v888
        %935 = vmatprep.subr.bf16.mxu0 0
        %936 = vmatpush2.bf16.msra.mxu0 %v887
        %937 = vmatprep.subr.bf16.mxu0 0
        %938 = vmatpush2.bf16.msra.mxu0 %v886
        %939 = vmatprep.subr.bf16.mxu0 0
        %940 = vmatpush2.bf16.msra.mxu0 %v885
        %941 = vmatprep.mubr.bf16.mxu0 %v686
        %942 = vmatmul.mubr.bf16.gmra.mxu0 %v685
        %v943 = vpop.f32.mrf.mxu0
        %v944 = vadd.f32 0.0, %v943
        %v945 = vpop.f32.mrf.mxu0
        %v946 = vpop.f32.mrf.mxu0
        %v947 = vadd.f32 0.0, %v946
        %v948 = vpop.f32.mrf.mxu0
        %949 = vmatprep.mubr.bf16.mxu0 %v688
        %950 = vmatmul.mubr.bf16.gmra.mxu0 %v687
        %v951 = vpop.f32.mrf.mxu0
        %v952 = vadd.f32 0.0, %v951
        %v953 = vpop.f32.mrf.mxu0
        %v954 = vpop.f32.mrf.mxu0
        %v955 = vadd.f32 0.0, %v954
        %v956 = vpop.f32.mrf.mxu0
        %957 = vmatprep.mubr.bf16.mxu0 %v690
        %958 = vmatmul.mubr.bf16.gmra.mxu0 %v689
        %v959 = vpop.f32.mrf.mxu0
        %v960 = vadd.f32 0.0, %v959
        %v961 = vpop.f32.mrf.mxu0
        %v962 = vpop.f32.mrf.mxu0
        %v963 = vadd.f32 0.0, %v962
        %v964 = vpop.f32.mrf.mxu0
        %965 = vmatprep.mubr.bf16.mxu0 %v692
        %966 = vmatmul.mubr.bf16.gmra.mxu0 %v691
        %v967 = vpop.f32.mrf.mxu0
        %v968 = vadd.f32 0.0, %v967
        %v969 = vpop.f32.mrf.mxu0
        %v970 = vpop.f32.mrf.mxu0
        %v971 = vadd.f32 0.0, %v970
        %v972 = vpop.f32.mrf.mxu0
        %973 = vmatprep.mubr.bf16.mxu0 %v694
        %974 = vmatmul.mubr.bf16.gmra.mxu0 %v693
        %v975 = vpop.f32.mrf.mxu0
        %v976 = vadd.f32 0.0, %v975
        %v977 = vpop.f32.mrf.mxu0
        %v978 = vpop.f32.mrf.mxu0
        %v979 = vadd.f32 0.0, %v978
        %v980 = vpop.f32.mrf.mxu0
        %981 = vmatprep.mubr.bf16.mxu0 %v696
        %982 = vmatmul.mubr.bf16.gmra.mxu0 %v695
        %v983 = vpop.f32.mrf.mxu0
        %v984 = vadd.f32 0.0, %v983
        %v985 = vpop.f32.mrf.mxu0
        %v986 = vpop.f32.mrf.mxu0
        %v987 = vadd.f32 0.0, %v986
        %v988 = vpop.f32.mrf.mxu0
        %989 = vmatprep.mubr.bf16.mxu0 %v698
        %990 = vmatmul.mubr.bf16.gmra.mxu0 %v697
        %v991 = vpop.f32.mrf.mxu0
        %v992 = vadd.f32 0.0, %v991
        %v993 = vpop.f32.mrf.mxu0
        %v994 = vpop.f32.mrf.mxu0
        %v995 = vadd.f32 0.0, %v994
        %v996 = vpop.f32.mrf.mxu0
        %997 = vmatprep.mubr.bf16.mxu0 %v700
        %998 = vmatmul.mubr.bf16.gmra.mxu0 %v699
        %v999 = vpop.f32.mrf.mxu0
        %v1000 = vadd.f32 0.0, %v999
        %v1001 = vpop.f32.mrf.mxu0
        %v1002 = vpop.f32.mrf.mxu0
        %v1003 = vadd.f32 0.0, %v1002
        %v1004 = vpop.f32.mrf.mxu0
        %1005 = vmatprep.mubr.bf16.mxu0 %v702
        %1006 = vmatmul.mubr.bf16.gmra.mxu0 %v701
        %v1007 = vpop.f32.mrf.mxu0
        %v1008 = vadd.f32 0.0, %v1007
        %v1009 = vpop.f32.mrf.mxu0
        %v1010 = vpop.f32.mrf.mxu0
        %v1011 = vadd.f32 0.0, %v1010
        %v1012 = vpop.f32.mrf.mxu0
        %1013 = vmatprep.mubr.bf16.mxu0 %v704
        %1014 = vmatmul.mubr.bf16.gmra.mxu0 %v703
        %v1015 = vpop.f32.mrf.mxu0
        %v1016 = vadd.f32 0.0, %v1015
        %v1017 = vpop.f32.mrf.mxu0
        %v1018 = vpop.f32.mrf.mxu0
        %v1019 = vadd.f32 0.0, %v1018
        %v1020 = vpop.f32.mrf.mxu0
        %1021 = vmatprep.mubr.bf16.mxu0 %v706
        %1022 = vmatmul.mubr.bf16.gmra.mxu0 %v705
        %v1023 = vpop.f32.mrf.mxu0
        %v1024 = vadd.f32 0.0, %v1023
        %v1025 = vpop.f32.mrf.mxu0
        %v1026 = vpop.f32.mrf.mxu0
        %v1027 = vadd.f32 0.0, %v1026
        %v1028 = vpop.f32.mrf.mxu0
        %1029 = vmatprep.mubr.bf16.mxu0 %v708
        %1030 = vmatmul.mubr.bf16.gmra.mxu0 %v707
        %v1031 = vpop.f32.mrf.mxu0
        %v1032 = vadd.f32 0.0, %v1031
        %v1033 = vpop.f32.mrf.mxu0
        %v1034 = vpop.f32.mrf.mxu0
        %v1035 = vadd.f32 0.0, %v1034
        %v1036 = vpop.f32.mrf.mxu0
        %1037 = vmatprep.mubr.bf16.mxu0 %v710
        %1038 = vmatmul.mubr.bf16.gmra.mxu0 %v709
        %v1039 = vpop.f32.mrf.mxu0
        %v1040 = vadd.f32 0.0, %v1039
        %v1041 = vpop.f32.mrf.mxu0
        %v1042 = vpop.f32.mrf.mxu0
        %v1043 = vadd.f32 0.0, %v1042
        %v1044 = vpop.f32.mrf.mxu0
        %1045 = vmatprep.mubr.bf16.mxu0 %v712
        %1046 = vmatmul.mubr.bf16.gmra.mxu0 %v711
        %v1047 = vpop.f32.mrf.mxu0
        %v1048 = vadd.f32 0.0, %v1047
        %v1049 = vpop.f32.mrf.mxu0
        %v1050 = vpop.f32.mrf.mxu0
        %v1051 = vadd.f32 0.0, %v1050
        %v1052 = vpop.f32.mrf.mxu0
        %1053 = vmatprep.mubr.bf16.mxu0 %v714
        %1054 = vmatmul.mubr.bf16.gmra.mxu0 %v713
        %v1055 = vpop.f32.mrf.mxu0
        %v1056 = vadd.f32 0.0, %v1055
        %v1057 = vpop.f32.mrf.mxu0
        %v1058 = vpop.f32.mrf.mxu0
        %v1059 = vadd.f32 0.0, %v1058
        %v1060 = vpop.f32.mrf.mxu0
        %1061 = vmatprep.mubr.bf16.mxu0 %v716
        %1062 = vmatmul.mubr.bf16.gmra.mxu0 %v715
        %v1063 = vpop.f32.mrf.mxu0
        %v1064 = vadd.f32 0.0, %v1063
        %v1065 = vpop.f32.mrf.mxu0
        %v1066 = vpop.f32.mrf.mxu0
        %v1067 = vadd.f32 0.0, %v1066
        %v1068 = vpop.f32.mrf.mxu0
        %1069 = vmatprep.mubr.bf16.mxu0 %v718
        %1070 = vmatmul.mubr.bf16.gmra.mxu0 %v717
        %v1071 = vpop.f32.mrf.mxu0
        %v1072 = vadd.f32 0.0, %v1071
        %v1073 = vpop.f32.mrf.mxu0
        %v1074 = vpop.f32.mrf.mxu0
        %v1075 = vadd.f32 0.0, %v1074
        %v1076 = vpop.f32.mrf.mxu0
        %1077 = vmatprep.mubr.bf16.mxu0 %v720
        %1078 = vmatmul.mubr.bf16.gmra.mxu0 %v719
        %v1079 = vpop.f32.mrf.mxu0
        %v1080 = vadd.f32 0.0, %v1079
        %v1081 = vpop.f32.mrf.mxu0
        %v1082 = vpop.f32.mrf.mxu0
        %v1083 = vadd.f32 0.0, %v1082
        %v1084 = vpop.f32.mrf.mxu0
        %1085 = vmatprep.mubr.bf16.mxu0 %v722
        %1086 = vmatmul.mubr.bf16.gmra.mxu0 %v721
        %v1087 = vpop.f32.mrf.mxu0
        %v1088 = vadd.f32 0.0, %v1087
        %v1089 = vpop.f32.mrf.mxu0
        %v1090 = vpop.f32.mrf.mxu0
        %v1091 = vadd.f32 0.0, %v1090
        %v1092 = vpop.f32.mrf.mxu0
        %1093 = vmatprep.mubr.bf16.mxu0 %v724
        %1094 = vmatmul.mubr.bf16.gmra.mxu0 %v723
        %v1095 = vpop.f32.mrf.mxu0
        %v1096 = vadd.f32 0.0, %v1095
        %v1097 = vpop.f32.mrf.mxu0
        %v1098 = vpop.f32.mrf.mxu0
        %v1099 = vadd.f32 0.0, %v1098
        %v1100 = vpop.f32.mrf.mxu0
        %1101 = vmatprep.mubr.bf16.mxu0 %v726
        %1102 = vmatmul.mubr.bf16.gmra.mxu0 %v725
        %v1103 = vpop.f32.mrf.mxu0
        %v1104 = vadd.f32 0.0, %v1103
        %v1105 = vpop.f32.mrf.mxu0
        %v1106 = vpop.f32.mrf.mxu0
        %v1107 = vadd.f32 0.0, %v1106
        %v1108 = vpop.f32.mrf.mxu0
        %1109 = vmatprep.mubr.bf16.mxu0 %v728
        %1110 = vmatmul.mubr.bf16.gmra.mxu0 %v727
        %v1111 = vpop.f32.mrf.mxu0
        %v1112 = vadd.f32 0.0, %v1111
        %v1113 = vpop.f32.mrf.mxu0
        %v1114 = vpop.f32.mrf.mxu0
        %v1115 = vadd.f32 0.0, %v1114
        %v1116 = vpop.f32.mrf.mxu0
        %1117 = vmatprep.mubr.bf16.mxu0 %v730
        %1118 = vmatmul.mubr.bf16.gmra.mxu0 %v729
        %v1119 = vpop.f32.mrf.mxu0
        %v1120 = vadd.f32 0.0, %v1119
        %v1121 = vpop.f32.mrf.mxu0
        %v1122 = vpop.f32.mrf.mxu0
        %v1123 = vadd.f32 0.0, %v1122
        %v1124 = vpop.f32.mrf.mxu0
        %1125 = vmatprep.mubr.bf16.mxu0 %v732
        %1126 = vmatmul.mubr.bf16.gmra.mxu0 %v731
        %v1127 = vpop.f32.mrf.mxu0
        %v1128 = vadd.f32 0.0, %v1127
        %v1129 = vpop.f32.mrf.mxu0
        %v1130 = vpop.f32.mrf.mxu0
        %v1131 = vadd.f32 0.0, %v1130
        %v1132 = vpop.f32.mrf.mxu0
        %1133 = vmatprep.mubr.bf16.mxu0 %v734
        %1134 = vmatmul.mubr.bf16.gmra.mxu0 %v733
        %v1135 = vpop.f32.mrf.mxu0
        %v1136 = vadd.f32 0.0, %v1135
        %v1137 = vpop.f32.mrf.mxu0
        %v1138 = vpop.f32.mrf.mxu0
        %v1139 = vadd.f32 0.0, %v1138
        %v1140 = vpop.f32.mrf.mxu0
        %1141 = vmatprep.mubr.bf16.mxu0 %v736
        %1142 = vmatmul.mubr.bf16.gmra.mxu0 %v735
        %v1143 = vpop.f32.mrf.mxu0
        %v1144 = vadd.f32 0.0, %v1143
        %v1145 = vpop.f32.mrf.mxu0
        %v1146 = vpop.f32.mrf.mxu0
        %v1147 = vadd.f32 0.0, %v1146
        %v1148 = vpop.f32.mrf.mxu0
        %1149 = vmatprep.mubr.bf16.mxu0 %v738
        %1150 = vmatmul.mubr.bf16.gmra.mxu0 %v737
        %v1151 = vpop.f32.mrf.mxu0
        %v1152 = vadd.f32 0.0, %v1151
        %v1153 = vpop.f32.mrf.mxu0
        %v1154 = vpop.f32.mrf.mxu0
        %v1155 = vadd.f32 0.0, %v1154
        %v1156 = vpop.f32.mrf.mxu0
        %1157 = vmatprep.mubr.bf16.mxu0 %v740
        %1158 = vmatmul.mubr.bf16.gmra.mxu0 %v739
        %v1159 = vpop.f32.mrf.mxu0
        %v1160 = vadd.f32 0.0, %v1159
        %v1161 = vpop.f32.mrf.mxu0
        %v1162 = vpop.f32.mrf.mxu0
        %v1163 = vadd.f32 0.0, %v1162
        %v1164 = vpop.f32.mrf.mxu0
        %1165 = vmatprep.mubr.bf16.mxu0 %v742
        %1166 = vmatmul.mubr.bf16.gmra.mxu0 %v741
        %v1167 = vpop.f32.mrf.mxu0
        %v1168 = vadd.f32 0.0, %v1167
        %v1169 = vpop.f32.mrf.mxu0
        %v1170 = vpop.f32.mrf.mxu0
        %v1171 = vadd.f32 0.0, %v1170
        %v1172 = vpop.f32.mrf.mxu0
        %1173 = vmatprep.mubr.bf16.mxu0 %v744
        %1174 = vmatmul.mubr.bf16.gmra.mxu0 %v743
        %v1175 = vpop.f32.mrf.mxu0
        %v1176 = vadd.f32 0.0, %v1175
        %v1177 = vpop.f32.mrf.mxu0
        %v1178 = vpop.f32.mrf.mxu0
        %v1179 = vadd.f32 0.0, %v1178
        %v1180 = vpop.f32.mrf.mxu0
        %1181 = vmatprep.mubr.bf16.mxu0 %v746
        %1182 = vmatmul.mubr.bf16.gmra.mxu0 %v745
        %v1183 = vpop.f32.mrf.mxu0
        %v1184 = vadd.f32 0.0, %v1183
        %v1185 = vpop.f32.mrf.mxu0
        %v1186 = vpop.f32.mrf.mxu0
        %v1187 = vadd.f32 0.0, %v1186
        %v1188 = vpop.f32.mrf.mxu0
        %1189 = vmatprep.mubr.bf16.mxu0 %v748
        %1190 = vmatmul.mubr.bf16.gmra.mxu0 %v747
        %v1191 = vpop.f32.mrf.mxu0
        %v1192 = vadd.f32 0.0, %v1191
        %v1193 = vpop.f32.mrf.mxu0
        %v1194 = vpop.f32.mrf.mxu0
        %v1195 = vadd.f32 0.0, %v1194
        %v1196 = vpop.f32.mrf.mxu0
        %1197 = vdwg.mxu0
        %v1198 = vadd.f32 %v333, %v944
        %v1199 = vadd.f32 %v334, %v947
        %v1200 = vadd.f32 %v335, %v952
        %v1201 = vadd.f32 %v336, %v955
        %v1202 = vadd.f32 %v337, %v960
        %v1203 = vadd.f32 %v338, %v963
        %v1204 = vadd.f32 %v339, %v968
        %v1205 = vadd.f32 %v340, %v971
        %v1206 = vadd.f32 %v341, %v976
        %v1207 = vadd.f32 %v342, %v979
        %v1208 = vadd.f32 %v343, %v984
        %v1209 = vadd.f32 %v344, %v987
        %v1210 = vadd.f32 %v345, %v992
        %v1211 = vadd.f32 %v346, %v995
        %v1212 = vadd.f32 %v347, %v1000
        %v1213 = vadd.f32 %v348, %v1003
        %v1214 = vadd.f32 %v349, %v1008
        %v1215 = vadd.f32 %v350, %v1011
        %v1216 = vadd.f32 %v351, %v1016
        %v1217 = vadd.f32 %v352, %v1019
        %v1218 = vadd.f32 %v353, %v1024
        %v1219 = vadd.f32 %v354, %v1027
        %v1220 = vadd.f32 %v355, %v1032
        %v1221 = vadd.f32 %v356, %v1035
        %v1222 = vadd.f32 %v357, %v1040
        %v1223 = vadd.f32 %v358, %v1043
        %v1224 = vadd.f32 %v359, %v1048
        %v1225 = vadd.f32 %v360, %v1051
        %v1226 = vadd.f32 %v361, %v1056
        %v1227 = vadd.f32 %v362, %v1059
        %v1228 = vadd.f32 %v363, %v1064
        %v1229 = vadd.f32 %v364, %v1067
        %v1230 = vadd.f32 %v365, %v1072
        %v1231 = vadd.f32 %v366, %v1075
        %v1232 = vadd.f32 %v367, %v1080
        %v1233 = vadd.f32 %v368, %v1083
        %v1234 = vadd.f32 %v369, %v1088
        %v1235 = vadd.f32 %v370, %v1091
        %v1236 = vadd.f32 %v371, %v1096
        %v1237 = vadd.f32 %v372, %v1099
        %v1238 = vadd.f32 %v373, %v1104
        %v1239 = vadd.f32 %v374, %v1107
        %v1240 = vadd.f32 %v375, %v1112
        %v1241 = vadd.f32 %v376, %v1115
        %v1242 = vadd.f32 %v377, %v1120
        %v1243 = vadd.f32 %v378, %v1123
        %v1244 = vadd.f32 %v379, %v1128
        %v1245 = vadd.f32 %v380, %v1131
        %v1246 = vadd.f32 %v381, %v1136
        %v1247 = vadd.f32 %v382, %v1139
        %v1248 = vadd.f32 %v383, %v1144
        %v1249 = vadd.f32 %v384, %v1147
        %v1250 = vadd.f32 %v385, %v1152
        %v1251 = vadd.f32 %v386, %v1155
        %v1252 = vadd.f32 %v387, %v1160
        %v1253 = vadd.f32 %v388, %v1163
        %v1254 = vadd.f32 %v389, %v1168
        %v1255 = vadd.f32 %v390, %v1171
        %v1256 = vadd.f32 %v391, %v1176
        %v1257 = vadd.f32 %v392, %v1179
        %v1258 = vadd.f32 %v393, %v1184
        %v1259 = vadd.f32 %v394, %v1187
        %v1260 = vadd.f32 %v395, %v1192
        %v1261 = vadd.f32 %v396, %v1195
        %1262 = vst [vmem:[#allocation2] sm:$0xff] %v1198
        %1263 = vst [vmem:[#allocation2 + $0x8] sm:$0xff] %v1199
        %1264 = vst [vmem:[#allocation2 + $0x10] sm:$0xff] %v1200
        %1265 = vst [vmem:[#allocation2 + $0x18] sm:$0xff] %v1201
        %1266 = vst [vmem:[#allocation2 + $0x20] sm:$0xff] %v1202
        %1267 = vst [vmem:[#allocation2 + $0x28] sm:$0xff] %v1203
        %1268 = vst [vmem:[#allocation2 + $0x30] sm:$0xff] %v1204
        %1269 = vst [vmem:[#allocation2 + $0x38] sm:$0xff] %v1205
        %1270 = vst [vmem:[#allocation2 + $0x40] sm:$0xff] %v1206
        %1271 = vst [vmem:[#allocation2 + $0x48] sm:$0xff] %v1207
        %1272 = vst [vmem:[#allocation2 + $0x50] sm:$0xff] %v1208
        %1273 = vst [vmem:[#allocation2 + $0x58] sm:$0xff] %v1209
        %1274 = vst [vmem:[#allocation2 + $0x60] sm:$0xff] %v1210
        %1275 = vst [vmem:[#allocation2 + $0x68] sm:$0xff] %v1211
        %1276 = vst [vmem:[#allocation2 + $0x70] sm:$0xff] %v1212
        %1277 = vst [vmem:[#allocation2 + $0x78] sm:$0xff] %v1213
        %1278 = vst [vmem:[#allocation2 + $0x80] sm:$0xff] %v1214
        %1279 = vst [vmem:[#allocation2 + $0x88] sm:$0xff] %v1215
        %1280 = vst [vmem:[#allocation2 + $0x90] sm:$0xff] %v1216
        %1281 = vst [vmem:[#allocation2 + $0x98] sm:$0xff] %v1217
        %1282 = vst [vmem:[#allocation2 + $0xa0] sm:$0xff] %v1218
        %1283 = vst [vmem:[#allocation2 + $0xa8] sm:$0xff] %v1219
        %1284 = vst [vmem:[#allocation2 + $0xb0] sm:$0xff] %v1220
        %1285 = vst [vmem:[#allocation2 + $0xb8] sm:$0xff] %v1221
        %1286 = vst [vmem:[#allocation2 + $0xc0] sm:$0xff] %v1222
        %1287 = vst [vmem:[#allocation2 + $0xc8] sm:$0xff] %v1223
        %1288 = vst [vmem:[#allocation2 + $0xd0] sm:$0xff] %v1224
        %1289 = vst [vmem:[#allocation2 + $0xd8] sm:$0xff] %v1225
        %1290 = vst [vmem:[#allocation2 + $0xe0] sm:$0xff] %v1226
        %1291 = vst [vmem:[#allocation2 + $0xe8] sm:$0xff] %v1227
        %1292 = vst [vmem:[#allocation2 + $0xf0] sm:$0xff] %v1228
        %1293 = vst [vmem:[#allocation2 + $0xf8] sm:$0xff] %v1229
        %1294 = vst [vmem:[#allocation2 + $0x100] sm:$0xff] %v1230
        %1295 = vst [vmem:[#allocation2 + $0x108] sm:$0xff] %v1231
        %1296 = vst [vmem:[#allocation2 + $0x110] sm:$0xff] %v1232
        %1297 = vst [vmem:[#allocation2 + $0x118] sm:$0xff] %v1233
        %1298 = vst [vmem:[#allocation2 + $0x120] sm:$0xff] %v1234
        %1299 = vst [vmem:[#allocation2 + $0x128] sm:$0xff] %v1235
        %1300 = vst [vmem:[#allocation2 + $0x130] sm:$0xff] %v1236
        %1301 = vst [vmem:[#allocation2 + $0x138] sm:$0xff] %v1237
        %1302 = vst [vmem:[#allocation2 + $0x140] sm:$0xff] %v1238
        %1303 = vst [vmem:[#allocation2 + $0x148] sm:$0xff] %v1239
        %1304 = vst [vmem:[#allocation2 + $0x150] sm:$0xff] %v1240
        %1305 = vst [vmem:[#allocation2 + $0x158] sm:$0xff] %v1241
        %1306 = vst [vmem:[#allocation2 + $0x160] sm:$0xff] %v1242
        %1307 = vst [vmem:[#allocation2 + $0x168] sm:$0xff] %v1243
        %1308 = vst [vmem:[#allocation2 + $0x170] sm:$0xff] %v1244
        %1309 = vst [vmem:[#allocation2 + $0x178] sm:$0xff] %v1245
        %1310 = vst [vmem:[#allocation2 + $0x180] sm:$0xff] %v1246
        %1311 = vst [vmem:[#allocation2 + $0x188] sm:$0xff] %v1247
        %1312 = vst [vmem:[#allocation2 + $0x190] sm:$0xff] %v1248
        %1313 = vst [vmem:[#allocation2 + $0x198] sm:$0xff] %v1249
        %1314 = vst [vmem:[#allocation2 + $0x1a0] sm:$0xff] %v1250
        %1315 = vst [vmem:[#allocation2 + $0x1a8] sm:$0xff] %v1251
        %1316 = vst [vmem:[#allocation2 + $0x1b0] sm:$0xff] %v1252
        %1317 = vst [vmem:[#allocation2 + $0x1b8] sm:$0xff] %v1253
        %1318 = vst [vmem:[#allocation2 + $0x1c0] sm:$0xff] %v1254
        %1319 = vst [vmem:[#allocation2 + $0x1c8] sm:$0xff] %v1255
        %1320 = vst [vmem:[#allocation2 + $0x1d0] sm:$0xff] %v1256
        %1321 = vst [vmem:[#allocation2 + $0x1d8] sm:$0xff] %v1257
        %1322 = vst [vmem:[#allocation2 + $0x1e0] sm:$0xff] %v1258
        %1323 = vst [vmem:[#allocation2 + $0x1e8] sm:$0xff] %v1259
        %1324 = vst [vmem:[#allocation2 + $0x1f0] sm:$0xff] %v1260
        %1325 = vst [vmem:[#allocation2 + $0x1f8] sm:$0xff] %v1261
        // Predicated region
        $region49: #{tpu_custom_call.1} parent=31 // pred_check
          %p1326 = pneg %p265
        $region50: #{tpu_custom_call.1} parent=31 // pred_check_branch
          %1328 = sbr.rel (%p1326) target = $region52
        $region51: #{tpu_custom_call.1} parent=31 // pred_region
          %v1329 = vld [vmem:[#allocation2] sm:$0xff]
          %v1330 = vld [vmem:[#allocation2 + $0x8] sm:$0xff]
          %v1331 = vld [vmem:[#allocation2 + $0x10] sm:$0xff]
          %v1332 = vld [vmem:[#allocation2 + $0x18] sm:$0xff]
          %v1333 = vld [vmem:[#allocation2 + $0x20] sm:$0xff]
          %v1334 = vld [vmem:[#allocation2 + $0x28] sm:$0xff]
          %v1335 = vld [vmem:[#allocation2 + $0x30] sm:$0xff]
          %v1336 = vld [vmem:[#allocation2 + $0x38] sm:$0xff]
          %v1337 = vld [vmem:[#allocation2 + $0x40] sm:$0xff]
          %v1338 = vld [vmem:[#allocation2 + $0x48] sm:$0xff]
          %v1339 = vld [vmem:[#allocation2 + $0x50] sm:$0xff]
          %v1340 = vld [vmem:[#allocation2 + $0x58] sm:$0xff]
          %v1341 = vld [vmem:[#allocation2 + $0x60] sm:$0xff]
          %v1342 = vld [vmem:[#allocation2 + $0x68] sm:$0xff]
          %v1343 = vld [vmem:[#allocation2 + $0x70] sm:$0xff]
          %v1344 = vld [vmem:[#allocation2 + $0x78] sm:$0xff]
          %v1345 = vld [vmem:[#allocation2 + $0x80] sm:$0xff]
          %v1346 = vld [vmem:[#allocation2 + $0x88] sm:$0xff]
          %v1347 = vld [vmem:[#allocation2 + $0x90] sm:$0xff]
          %v1348 = vld [vmem:[#allocation2 + $0x98] sm:$0xff]
          %v1349 = vld [vmem:[#allocation2 + $0xa0] sm:$0xff]
          %v1350 = vld [vmem:[#allocation2 + $0xa8] sm:$0xff]
          %v1351 = vld [vmem:[#allocation2 + $0xb0] sm:$0xff]
          %v1352 = vld [vmem:[#allocation2 + $0xb8] sm:$0xff]
          %v1353 = vld [vmem:[#allocation2 + $0xc0] sm:$0xff]
          %v1354 = vld [vmem:[#allocation2 + $0xc8] sm:$0xff]
          %v1355 = vld [vmem:[#allocation2 + $0xd0] sm:$0xff]
          %v1356 = vld [vmem:[#allocation2 + $0xd8] sm:$0xff]
          %v1357 = vld [vmem:[#allocation2 + $0xe0] sm:$0xff]
          %v1358 = vld [vmem:[#allocation2 + $0xe8] sm:$0xff]
          %v1359 = vld [vmem:[#allocation2 + $0xf0] sm:$0xff]
          %v1360 = vld [vmem:[#allocation2 + $0xf8] sm:$0xff]
          %v1361 = vld [vmem:[#allocation2 + $0x100] sm:$0xff]
          %v1362 = vld [vmem:[#allocation2 + $0x108] sm:$0xff]
          %v1363 = vld [vmem:[#allocation2 + $0x110] sm:$0xff]
          %v1364 = vld [vmem:[#allocation2 + $0x118] sm:$0xff]
          %v1365 = vld [vmem:[#allocation2 + $0x120] sm:$0xff]
          %v1366 = vld [vmem:[#allocation2 + $0x128] sm:$0xff]
          %v1367 = vld [vmem:[#allocation2 + $0x130] sm:$0xff]
          %v1368 = vld [vmem:[#allocation2 + $0x138] sm:$0xff]
          %v1369 = vld [vmem:[#allocation2 + $0x140] sm:$0xff]
          %v1370 = vld [vmem:[#allocation2 + $0x148] sm:$0xff]
          %v1371 = vld [vmem:[#allocation2 + $0x150] sm:$0xff]
          %v1372 = vld [vmem:[#allocation2 + $0x158] sm:$0xff]
          %v1373 = vld [vmem:[#allocation2 + $0x160] sm:$0xff]
          %v1374 = vld [vmem:[#allocation2 + $0x168] sm:$0xff]
          %v1375 = vld [vmem:[#allocation2 + $0x170] sm:$0xff]
          %v1376 = vld [vmem:[#allocation2 + $0x178] sm:$0xff]
          %v1377 = vld [vmem:[#allocation2 + $0x180] sm:$0xff]
          %v1378 = vld [vmem:[#allocation2 + $0x188] sm:$0xff]
          %v1379 = vld [vmem:[#allocation2 + $0x190] sm:$0xff]
          %v1380 = vld [vmem:[#allocation2 + $0x198] sm:$0xff]
          %v1381 = vld [vmem:[#allocation2 + $0x1a0] sm:$0xff]
          %v1382 = vld [vmem:[#allocation2 + $0x1a8] sm:$0xff]
          %v1383 = vld [vmem:[#allocation2 + $0x1b0] sm:$0xff]
          %v1384 = vld [vmem:[#allocation2 + $0x1b8] sm:$0xff]
          %v1385 = vld [vmem:[#allocation2 + $0x1c0] sm:$0xff]
          %v1386 = vld [vmem:[#allocation2 + $0x1c8] sm:$0xff]
          %v1387 = vld [vmem:[#allocation2 + $0x1d0] sm:$0xff]
          %v1388 = vld [vmem:[#allocation2 + $0x1d8] sm:$0xff]
          %v1389 = vld [vmem:[#allocation2 + $0x1e0] sm:$0xff]
          %v1390 = vld [vmem:[#allocation2 + $0x1e8] sm:$0xff]
          %v1391 = vld [vmem:[#allocation2 + $0x1f0] sm:$0xff]
          %v1392 = vld [vmem:[#allocation2 + $0x1f8] sm:$0xff]
          %v1393 = vld [vmem:[#allocation8] sm:$0x1]
          %v1395 = vlaneseq
          %v1396 = vshrl.u32 %v1395, 7
          %v1397 = vsub.s32 0, %v1396
          %v1398 = vrot.slane %v1393, %v1397
          %v1400 = vadd.f32 %v1329, %v1398
          %v1401 = vadd.f32 %v1330, %v1398
          %v1402 = vadd.f32 %v1331, %v1398
          %v1403 = vadd.f32 %v1332, %v1398
          %v1404 = vadd.f32 %v1333, %v1398
          %v1405 = vadd.f32 %v1334, %v1398
          %v1406 = vadd.f32 %v1335, %v1398
          %v1407 = vadd.f32 %v1336, %v1398
          %v1408 = vadd.f32 %v1337, %v1398
          %v1409 = vadd.f32 %v1338, %v1398
          %v1410 = vadd.f32 %v1339, %v1398
          %v1411 = vadd.f32 %v1340, %v1398
          %v1412 = vadd.f32 %v1341, %v1398
          %v1413 = vadd.f32 %v1342, %v1398
          %v1414 = vadd.f32 %v1343, %v1398
          %v1415 = vadd.f32 %v1344, %v1398
          %v1416 = vadd.f32 %v1345, %v1398
          %v1417 = vadd.f32 %v1346, %v1398
          %v1418 = vadd.f32 %v1347, %v1398
          %v1419 = vadd.f32 %v1348, %v1398
          %v1420 = vadd.f32 %v1349, %v1398
          %v1421 = vadd.f32 %v1350, %v1398
          %v1422 = vadd.f32 %v1351, %v1398
          %v1423 = vadd.f32 %v1352, %v1398
          %v1424 = vadd.f32 %v1353, %v1398
          %v1425 = vadd.f32 %v1354, %v1398
          %v1426 = vadd.f32 %v1355, %v1398
          %v1427 = vadd.f32 %v1356, %v1398
          %v1428 = vadd.f32 %v1357, %v1398
          %v1429 = vadd.f32 %v1358, %v1398
          %v1430 = vadd.f32 %v1359, %v1398
          %v1431 = vadd.f32 %v1360, %v1398
          %v1432 = vadd.f32 %v1361, %v1398
          %v1433 = vadd.f32 %v1362, %v1398
          %v1434 = vadd.f32 %v1363, %v1398
          %v1435 = vadd.f32 %v1364, %v1398
          %v1436 = vadd.f32 %v1365, %v1398
          %v1437 = vadd.f32 %v1366, %v1398
          %v1438 = vadd.f32 %v1367, %v1398
          %v1439 = vadd.f32 %v1368, %v1398
          %v1440 = vadd.f32 %v1369, %v1398
          %v1441 = vadd.f32 %v1370, %v1398
          %v1442 = vadd.f32 %v1371, %v1398
          %v1443 = vadd.f32 %v1372, %v1398
          %v1444 = vadd.f32 %v1373, %v1398
          %v1445 = vadd.f32 %v1374, %v1398
          %v1446 = vadd.f32 %v1375, %v1398
          %v1447 = vadd.f32 %v1376, %v1398
          %v1448 = vadd.f32 %v1377, %v1398
          %v1449 = vadd.f32 %v1378, %v1398
          %v1450 = vadd.f32 %v1379, %v1398
          %v1451 = vadd.f32 %v1380, %v1398
          %v1452 = vadd.f32 %v1381, %v1398
          %v1453 = vadd.f32 %v1382, %v1398
          %v1454 = vadd.f32 %v1383, %v1398
          %v1455 = vadd.f32 %v1384, %v1398
          %v1456 = vadd.f32 %v1385, %v1398
          %v1457 = vadd.f32 %v1386, %v1398
          %v1458 = vadd.f32 %v1387, %v1398
          %v1459 = vadd.f32 %v1388, %v1398
          %v1460 = vadd.f32 %v1389, %v1398
          %v1461 = vadd.f32 %v1390, %v1398
          %v1462 = vadd.f32 %v1391, %v1398
          %v1463 = vadd.f32 %v1392, %v1398
          %v1464 = vmax.f32 %v1400, 0.0
          %v1465 = vmax.f32 %v1401, 0.0
          %v1466 = vmax.f32 %v1402, 0.0
          %v1467 = vmax.f32 %v1403, 0.0
          %v1468 = vmax.f32 %v1404, 0.0
          %v1469 = vmax.f32 %v1405, 0.0
          %v1470 = vmax.f32 %v1406, 0.0
          %v1471 = vmax.f32 %v1407, 0.0
          %v1472 = vmax.f32 %v1408, 0.0
          %v1473 = vmax.f32 %v1409, 0.0
          %v1474 = vmax.f32 %v1410, 0.0
          %v1475 = vmax.f32 %v1411, 0.0
          %v1476 = vmax.f32 %v1412, 0.0
          %v1477 = vmax.f32 %v1413, 0.0
          %v1478 = vmax.f32 %v1414, 0.0
          %v1479 = vmax.f32 %v1415, 0.0
          %v1480 = vmax.f32 %v1416, 0.0
          %v1481 = vmax.f32 %v1417, 0.0
          %v1482 = vmax.f32 %v1418, 0.0
          %v1483 = vmax.f32 %v1419, 0.0
          %v1484 = vmax.f32 %v1420, 0.0
          %v1485 = vmax.f32 %v1421, 0.0
          %v1486 = vmax.f32 %v1422, 0.0
          %v1487 = vmax.f32 %v1423, 0.0
          %v1488 = vmax.f32 %v1424, 0.0
          %v1489 = vmax.f32 %v1425, 0.0
          %v1490 = vmax.f32 %v1426, 0.0
          %v1491 = vmax.f32 %v1427, 0.0
          %v1492 = vmax.f32 %v1428, 0.0
          %v1493 = vmax.f32 %v1429, 0.0
          %v1494 = vmax.f32 %v1430, 0.0
          %v1495 = vmax.f32 %v1431, 0.0
          %v1496 = vmax.f32 %v1432, 0.0
          %v1497 = vmax.f32 %v1433, 0.0
          %v1498 = vmax.f32 %v1434, 0.0
          %v1499 = vmax.f32 %v1435, 0.0
          %v1500 = vmax.f32 %v1436, 0.0
          %v1501 = vmax.f32 %v1437, 0.0
          %v1502 = vmax.f32 %v1438, 0.0
          %v1503 = vmax.f32 %v1439, 0.0
          %v1504 = vmax.f32 %v1440, 0.0
          %v1505 = vmax.f32 %v1441, 0.0
          %v1506 = vmax.f32 %v1442, 0.0
          %v1507 = vmax.f32 %v1443, 0.0
          %v1508 = vmax.f32 %v1444, 0.0
          %v1509 = vmax.f32 %v1445, 0.0
          %v1510 = vmax.f32 %v1446, 0.0
          %v1511 = vmax.f32 %v1447, 0.0
          %v1512 = vmax.f32 %v1448, 0.0
          %v1513 = vmax.f32 %v1449, 0.0
          %v1514 = vmax.f32 %v1450, 0.0
          %v1515 = vmax.f32 %v1451, 0.0
          %v1516 = vmax.f32 %v1452, 0.0
          %v1517 = vmax.f32 %v1453, 0.0
          %v1518 = vmax.f32 %v1454, 0.0
          %v1519 = vmax.f32 %v1455, 0.0
          %v1520 = vmax.f32 %v1456, 0.0
          %v1521 = vmax.f32 %v1457, 0.0
          %v1522 = vmax.f32 %v1458, 0.0
          %v1523 = vmax.f32 %v1459, 0.0
          %v1524 = vmax.f32 %v1460, 0.0
          %v1525 = vmax.f32 %v1461, 0.0
          %v1526 = vmax.f32 %v1462, 0.0
          %v1527 = vmax.f32 %v1463, 0.0
          %v1528 = vpack.c.bf16 %v1465, %v1464
          %v1529 = vpack.c.bf16 %v1467, %v1466
          %v1530 = vpack.c.bf16 %v1469, %v1468
          %v1531 = vpack.c.bf16 %v1471, %v1470
          %v1532 = vpack.c.bf16 %v1473, %v1472
          %v1533 = vpack.c.bf16 %v1475, %v1474
          %v1534 = vpack.c.bf16 %v1477, %v1476
          %v1535 = vpack.c.bf16 %v1479, %v1478
          %v1536 = vpack.c.bf16 %v1481, %v1480
          %v1537 = vpack.c.bf16 %v1483, %v1482
          %v1538 = vpack.c.bf16 %v1485, %v1484
          %v1539 = vpack.c.bf16 %v1487, %v1486
          %v1540 = vpack.c.bf16 %v1489, %v1488
          %v1541 = vpack.c.bf16 %v1491, %v1490
          %v1542 = vpack.c.bf16 %v1493, %v1492
          %v1543 = vpack.c.bf16 %v1495, %v1494
          %v1544 = vpack.c.bf16 %v1497, %v1496
          %v1545 = vpack.c.bf16 %v1499, %v1498
          %v1546 = vpack.c.bf16 %v1501, %v1500
          %v1547 = vpack.c.bf16 %v1503, %v1502
          %v1548 = vpack.c.bf16 %v1505, %v1504
          %v1549 = vpack.c.bf16 %v1507, %v1506
          %v1550 = vpack.c.bf16 %v1509, %v1508
          %v1551 = vpack.c.bf16 %v1511, %v1510
          %v1552 = vpack.c.bf16 %v1513, %v1512
          %v1553 = vpack.c.bf16 %v1515, %v1514
          %v1554 = vpack.c.bf16 %v1517, %v1516
          %v1555 = vpack.c.bf16 %v1519, %v1518
          %v1556 = vpack.c.bf16 %v1521, %v1520
          %v1557 = vpack.c.bf16 %v1523, %v1522
          %v1558 = vpack.c.bf16 %v1525, %v1524
          %v1559 = vpack.c.bf16 %v1527, %v1526
          %v1592 = vunpack.c.l.b16 %v1528
          %v1593 = vunpack.c.h.b16 %v1528
          %v1594 = vunpack.c.l.b16 %v1529
          %v1595 = vunpack.c.h.b16 %v1529
          %v1596 = vunpack.c.l.b16 %v1530
          %v1597 = vunpack.c.h.b16 %v1530
          %v1598 = vunpack.c.l.b16 %v1531
          %v1599 = vunpack.c.h.b16 %v1531
          %v1600 = vunpack.c.l.b16 %v1532
          %v1601 = vunpack.c.h.b16 %v1532
          %v1602 = vunpack.c.l.b16 %v1533
          %v1603 = vunpack.c.h.b16 %v1533
          %v1604 = vunpack.c.l.b16 %v1534
          %v1605 = vunpack.c.h.b16 %v1534
          %v1606 = vunpack.c.l.b16 %v1535
          %v1607 = vunpack.c.h.b16 %v1535
          %v1608 = vunpack.c.l.b16 %v1536
          %v1609 = vunpack.c.h.b16 %v1536
          %v1610 = vunpack.c.l.b16 %v1537
          %v1611 = vunpack.c.h.b16 %v1537
          %v1612 = vunpack.c.l.b16 %v1538
          %v1613 = vunpack.c.h.b16 %v1538
          %v1614 = vunpack.c.l.b16 %v1539
          %v1615 = vunpack.c.h.b16 %v1539
          %v1616 = vunpack.c.l.b16 %v1540
          %v1617 = vunpack.c.h.b16 %v1540
          %v1618 = vunpack.c.l.b16 %v1541
          %v1619 = vunpack.c.h.b16 %v1541
          %v1620 = vunpack.c.l.b16 %v1542
          %v1621 = vunpack.c.h.b16 %v1542
          %v1622 = vunpack.c.l.b16 %v1543
          %v1623 = vunpack.c.h.b16 %v1543
          %v1624 = vunpack.c.l.b16 %v1544
          %v1625 = vunpack.c.h.b16 %v1544
          %v1626 = vunpack.c.l.b16 %v1545
          %v1627 = vunpack.c.h.b16 %v1545
          %v1628 = vunpack.c.l.b16 %v1546
          %v1629 = vunpack.c.h.b16 %v1546
          %v1630 = vunpack.c.l.b16 %v1547
          %v1631 = vunpack.c.h.b16 %v1547
          %v1632 = vunpack.c.l.b16 %v1548
          %v1633 = vunpack.c.h.b16 %v1548
          %v1634 = vunpack.c.l.b16 %v1549
          %v1635 = vunpack.c.h.b16 %v1549
          %v1636 = vunpack.c.l.b16 %v1550
          %v1637 = vunpack.c.h.b16 %v1550
          %v1638 = vunpack.c.l.b16 %v1551
          %v1639 = vunpack.c.h.b16 %v1551
          %v1640 = vunpack.c.l.b16 %v1552
          %v1641 = vunpack.c.h.b16 %v1552
          %v1642 = vunpack.c.l.b16 %v1553
          %v1643 = vunpack.c.h.b16 %v1553
          %v1644 = vunpack.c.l.b16 %v1554
          %v1645 = vunpack.c.h.b16 %v1554
          %v1646 = vunpack.c.l.b16 %v1555
          %v1647 = vunpack.c.h.b16 %v1555
          %v1648 = vunpack.c.l.b16 %v1556
          %v1649 = vunpack.c.h.b16 %v1556
          %v1650 = vunpack.c.l.b16 %v1557
          %v1651 = vunpack.c.h.b16 %v1557
          %v1652 = vunpack.c.l.b16 %v1558
          %v1653 = vunpack.c.h.b16 %v1558
          %v1654 = vunpack.c.l.b16 %v1559
          %v1655 = vunpack.c.h.b16 %v1559
          %v1656 = vpack.c.b16 %v1592, %v1592
          %v1657 = vpack.c.b16 %v1593, %v1593
          %v1658 = vpack.c.b16 %v1594, %v1594
          %v1659 = vpack.c.b16 %v1595, %v1595
          %v1660 = vpack.c.b16 %v1596, %v1596
          %v1661 = vpack.c.b16 %v1597, %v1597
          %v1662 = vpack.c.b16 %v1598, %v1598
          %v1663 = vpack.c.b16 %v1599, %v1599
          %v1664 = vpack.c.b16 %v1600, %v1600
          %v1665 = vpack.c.b16 %v1601, %v1601
          %v1666 = vpack.c.b16 %v1602, %v1602
          %v1667 = vpack.c.b16 %v1603, %v1603
          %v1668 = vpack.c.b16 %v1604, %v1604
          %v1669 = vpack.c.b16 %v1605, %v1605
          %v1670 = vpack.c.b16 %v1606, %v1606
          %v1671 = vpack.c.b16 %v1607, %v1607
          %v1672 = vpack.c.b16 %v1608, %v1608
          %v1673 = vpack.c.b16 %v1609, %v1609
          %v1674 = vpack.c.b16 %v1610, %v1610
          %v1675 = vpack.c.b16 %v1611, %v1611
          %v1676 = vpack.c.b16 %v1612, %v1612
          %v1677 = vpack.c.b16 %v1613, %v1613
          %v1678 = vpack.c.b16 %v1614, %v1614
          %v1679 = vpack.c.b16 %v1615, %v1615
          %v1680 = vpack.c.b16 %v1616, %v1616
          %v1681 = vpack.c.b16 %v1617, %v1617
          %v1682 = vpack.c.b16 %v1618, %v1618
          %v1683 = vpack.c.b16 %v1619, %v1619
          %v1684 = vpack.c.b16 %v1620, %v1620
          %v1685 = vpack.c.b16 %v1621, %v1621
          %v1686 = vpack.c.b16 %v1622, %v1622
          %v1687 = vpack.c.b16 %v1623, %v1623
          %v1688 = vpack.c.b16 %v1624, %v1624
          %v1689 = vpack.c.b16 %v1625, %v1625
          %v1690 = vpack.c.b16 %v1626, %v1626
          %v1691 = vpack.c.b16 %v1627, %v1627
          %v1692 = vpack.c.b16 %v1628, %v1628
          %v1693 = vpack.c.b16 %v1629, %v1629
          %v1694 = vpack.c.b16 %v1630, %v1630
          %v1695 = vpack.c.b16 %v1631, %v1631
          %v1696 = vpack.c.b16 %v1632, %v1632
          %v1697 = vpack.c.b16 %v1633, %v1633
          %v1698 = vpack.c.b16 %v1634, %v1634
          %v1699 = vpack.c.b16 %v1635, %v1635
          %v1700 = vpack.c.b16 %v1636, %v1636
          %v1701 = vpack.c.b16 %v1637, %v1637
          %v1702 = vpack.c.b16 %v1638, %v1638
          %v1703 = vpack.c.b16 %v1639, %v1639
          %v1704 = vpack.c.b16 %v1640, %v1640
          %v1705 = vpack.c.b16 %v1641, %v1641
          %v1706 = vpack.c.b16 %v1642, %v1642
          %v1707 = vpack.c.b16 %v1643, %v1643
          %v1708 = vpack.c.b16 %v1644, %v1644
          %v1709 = vpack.c.b16 %v1645, %v1645
          %v1710 = vpack.c.b16 %v1646, %v1646
          %v1711 = vpack.c.b16 %v1647, %v1647
          %v1712 = vpack.c.b16 %v1648, %v1648
          %v1713 = vpack.c.b16 %v1649, %v1649
          %v1714 = vpack.c.b16 %v1650, %v1650
          %v1715 = vpack.c.b16 %v1651, %v1651
          %v1716 = vpack.c.b16 %v1652, %v1652
          %v1717 = vpack.c.b16 %v1653, %v1653
          %v1718 = vpack.c.b16 %v1654, %v1654
          %v1719 = vpack.c.b16 %v1655, %v1655
          %1784 = vst [vmem:[%s259] sm:$0xf] %v1656
          %1785 = vst [vmem:[%s259 + $0x4] sm:$0xf] %v1657
          %1786 = vst [vmem:[%s259 + $0x8] sm:$0xf] %v1658
          %1787 = vst [vmem:[%s259 + $0xc] sm:$0xf] %v1659
          %1788 = vst [vmem:[%s259 + $0x10] sm:$0xf] %v1660
          %1789 = vst [vmem:[%s259 + $0x14] sm:$0xf] %v1661
          %1790 = vst [vmem:[%s259 + $0x18] sm:$0xf] %v1662
          %1791 = vst [vmem:[%s259 + $0x1c] sm:$0xf] %v1663
          %1792 = vst [vmem:[%s259 + $0x20] sm:$0xf] %v1664
          %1793 = vst [vmem:[%s259 + $0x24] sm:$0xf] %v1665
          %1794 = vst [vmem:[%s259 + $0x28] sm:$0xf] %v1666
          %1795 = vst [vmem:[%s259 + $0x2c] sm:$0xf] %v1667
          %1796 = vst [vmem:[%s259 + $0x30] sm:$0xf] %v1668
          %1797 = vst [vmem:[%s259 + $0x34] sm:$0xf] %v1669
          %1798 = vst [vmem:[%s259 + $0x38] sm:$0xf] %v1670
          %1799 = vst [vmem:[%s259 + $0x3c] sm:$0xf] %v1671
          %1800 = vst [vmem:[%s259 + $0x40] sm:$0xf] %v1672
          %1801 = vst [vmem:[%s259 + $0x44] sm:$0xf] %v1673
          %1802 = vst [vmem:[%s259 + $0x48] sm:$0xf] %v1674
          %1803 = vst [vmem:[%s259 + $0x4c] sm:$0xf] %v1675
          %1804 = vst [vmem:[%s259 + $0x50] sm:$0xf] %v1676
          %1805 = vst [vmem:[%s259 + $0x54] sm:$0xf] %v1677
          %1806 = vst [vmem:[%s259 + $0x58] sm:$0xf] %v1678
          %1807 = vst [vmem:[%s259 + $0x5c] sm:$0xf] %v1679
          %1808 = vst [vmem:[%s259 + $0x60] sm:$0xf] %v1680
          %1809 = vst [vmem:[%s259 + $0x64] sm:$0xf] %v1681
          %1810 = vst [vmem:[%s259 + $0x68] sm:$0xf] %v1682
          %1811 = vst [vmem:[%s259 + $0x6c] sm:$0xf] %v1683
          %1812 = vst [vmem:[%s259 + $0x70] sm:$0xf] %v1684
          %1813 = vst [vmem:[%s259 + $0x74] sm:$0xf] %v1685
          %1814 = vst [vmem:[%s259 + $0x78] sm:$0xf] %v1686
          %1815 = vst [vmem:[%s259 + $0x7c] sm:$0xf] %v1687
          %1816 = vst [vmem:[%s259 + $0x80] sm:$0xf] %v1688
          %1817 = vst [vmem:[%s259 + $0x84] sm:$0xf] %v1689
          %1818 = vst [vmem:[%s259 + $0x88] sm:$0xf] %v1690
          %1819 = vst [vmem:[%s259 + $0x8c] sm:$0xf] %v1691
          %1820 = vst [vmem:[%s259 + $0x90] sm:$0xf] %v1692
          %1821 = vst [vmem:[%s259 + $0x94] sm:$0xf] %v1693
          %1822 = vst [vmem:[%s259 + $0x98] sm:$0xf] %v1694
          %1823 = vst [vmem:[%s259 + $0x9c] sm:$0xf] %v1695
          %1824 = vst [vmem:[%s259 + $0xa0] sm:$0xf] %v1696
          %1825 = vst [vmem:[%s259 + $0xa4] sm:$0xf] %v1697
          %1826 = vst [vmem:[%s259 + $0xa8] sm:$0xf] %v1698
          %1827 = vst [vmem:[%s259 + $0xac] sm:$0xf] %v1699
          %1828 = vst [vmem:[%s259 + $0xb0] sm:$0xf] %v1700
          %1829 = vst [vmem:[%s259 + $0xb4] sm:$0xf] %v1701
          %1830 = vst [vmem:[%s259 + $0xb8] sm:$0xf] %v1702
          %1831 = vst [vmem:[%s259 + $0xbc] sm:$0xf] %v1703
          %1832 = vst [vmem:[%s259 + $0xc0] sm:$0xf] %v1704
          %1833 = vst [vmem:[%s259 + $0xc4] sm:$0xf] %v1705
          %1834 = vst [vmem:[%s259 + $0xc8] sm:$0xf] %v1706
          %1835 = vst [vmem:[%s259 + $0xcc] sm:$0xf] %v1707
          %1836 = vst [vmem:[%s259 + $0xd0] sm:$0xf] %v1708
          %1837 = vst [vmem:[%s259 + $0xd4] sm:$0xf] %v1709
          %1838 = vst [vmem:[%s259 + $0xd8] sm:$0xf] %v1710
          %1839 = vst [vmem:[%s259 + $0xdc] sm:$0xf] %v1711
          %1840 = vst [vmem:[%s259 + $0xe0] sm:$0xf] %v1712
          %1841 = vst [vmem:[%s259 + $0xe4] sm:$0xf] %v1713
          %1842 = vst [vmem:[%s259 + $0xe8] sm:$0xf] %v1714
          %1843 = vst [vmem:[%s259 + $0xec] sm:$0xf] %v1715
          %1844 = vst [vmem:[%s259 + $0xf0] sm:$0xf] %v1716
          %1845 = vst [vmem:[%s259 + $0xf4] sm:$0xf] %v1717
          %1846 = vst [vmem:[%s259 + $0xf8] sm:$0xf] %v1718
          %1847 = vst [vmem:[%s259 + $0xfc] sm:$0xf] %v1719
        $region52: #{tpu_custom_call.1} parent=31 // pred_fallthru
          _
        %s1848 = sand.u32 %s132, 1
        %s1849 = scalar_lea.sflag [#allocation5], %s1848
        %s1850 = sand.u32 %s132, 1
        %s1851 = smul.addr %s1850, 256
        %s1852 = scalar_lea.vmem [#allocation9], %s1851
        // Predicated region
        $region53: #{tpu_custom_call.1} parent=31 // pred_check
          %p1853 = pneg %p142
        $region54: #{tpu_custom_call.1} parent=31 // pred_check_branch
          %1855 = sbr.rel (%p1853) target = $region56
        $region55: #{tpu_custom_call.1} parent=31 // pred_region
          %s1856 = smul.u32 64, %s26
          %s1858 = ssub.s32 4096, 4096
          %1859 = vsyncadd %s1849, %s1858
          %s1860 = sadd.s32 %s27, %s1856
          %s1861 = smul.addr %s1860, 64
          %s1862 = scalar_lea.hbm %s3, %s1861
          %s1863 = sshll.u32 %s1852, 4
          %s1864 = int_to_ptr.vmem [resolvable:$true] %s1863
          %1869 = dma.vmem_to_hbm [thread:$0]  %s1864, 4096, %s1862, %s1849, 64, 64, 4
        $region56: #{tpu_custom_call.1} parent=31 // pred_fallthru
          _
      $region32: #{tpu_custom_call.1} parent=5 // pred_fallthru
        _
      %p1870 = scmp.le.s32.totalorder 2, %s16
      // Predicated region
      $region57: #{tpu_custom_call.1} parent=5 // pred_check
        %p1871 = pneg %p1870
      $region58: #{tpu_custom_call.1} parent=5 // pred_check_branch
        %1873 = sbr.rel (%p1871) target = $region60
      $region59: #{tpu_custom_call.1} parent=5 // pred_region
        %s1874 = ssub.s32 %s16, 2
        // Predicated region
        $region61: #{tpu_custom_call.1} parent=59 // pred_check
          %p1875 = pneg %p148
        $region62: #{tpu_custom_call.1} parent=59 // pred_check_branch
          %1877 = sbr.rel (%p1875) target = $region64
        $region63: #{tpu_custom_call.1} parent=59 // pred_region
          %s1878 = sand.u32 %s133, 1
          %s1879 = scalar_lea.sflag [#allocation5], %s1878
          %s1880 = sand.u32 %s133, 1
          %s1881 = smul.addr %s1880, 256
          %s1882 = scalar_lea.vmem [#allocation9], %s1881
          %1883 = dma.done %s1879, 4096
        $region64: #{tpu_custom_call.1} parent=59 // pred_fallthru
          _
      $region60: #{tpu_custom_call.1} parent=5 // pred_fallthru
        _
    $region6: #{tpu_custom_call.1} parent=1 // loop_footer
      %s20 = sadd.s32 1, %s16
    $region7: #{tpu_custom_call.1} parent=1 // loop_footer_branch
      %15 = sbr.rel target = $region3
    $region8: #{tpu_custom_call.1} parent=1 // loop_exit
      _
    %1884 = vsyncpa [#allocation4], 1
    %s1885 = scalar_lea.sflag [#allocation4], 1
    %1886 = vsyncpa %s1885, 1
    %1887 = vsyncpa [#allocation7], 1
    %1888 = vsyncpa [#allocation5], 1
    %s1889 = scalar_lea.sflag [#allocation5], 1
    %1890 = vsyncpa %s1889, 1

</llo_original>
